<compile_context>
chip_gen: v7x
topology: tpu7x:2x2x1
jax: 0.10.0
libtpu: 0.0.40
codegen_flags: <defaults>
</compile_context>

<pallas_src>
import jax
import jax.numpy as jnp
from jax import lax
from jax.experimental import pallas as pl
from jax.experimental.pallas import tpu as pltpu

TB = 8  # bags per grid step (one sublane tile)


def _round_up(x, m):
    return ((x + m - 1) // m) * m


def text_classifier_kernel(ids_ref, starts_ref, lens_ref,      # scalar prefetch (SMEM)
                           emb_hbm, fcwt_ref, bias_ref,        # inputs
                           out_ref,                            # output (TB, C_pad)
                           ebuf, sem, pooled_ref):             # scratch
    tile = pl.program_id(0)
    n_tokens = ids_ref.shape[0]           # static
    d_pad = pooled_ref.shape[1]           # static

    def fetch(pos, slot):
        # token position -> row of the embedding table (ids pre-clamped to [0, V-1])
        row = ids_ref[pos]
        pltpu.make_async_copy(emb_hbm.at[pl.ds(row, 1), :],
                              ebuf.at[slot], sem.at[slot]).start()

    def wait(slot):
        pltpu.make_async_copy(emb_hbm.at[pl.ds(0, 1), :],
                              ebuf.at[slot], sem.at[slot]).wait()

    # --- gather + mean-pool TB bags into pooled_ref (static unroll over the tile) ---
    for bb in range(TB):
        bag = tile * TB + bb
        start = starts_ref[bag]
        num = lens_ref[bag]

        @pl.when(num > 0)
        def _prime():
            fetch(jnp.minimum(start, n_tokens - 1), 0)

        def token_body(i, acc):
            slot = lax.rem(i, 2)
            wait(slot)                              # row for step i has landed

            @pl.when(i + 1 < num)
            def _prefetch_next():
                fetch(jnp.minimum(start + i + 1, n_tokens - 1), 1 - slot)

            return acc + ebuf[slot]                 # (1, D_pad) accumulate

        acc0 = jnp.zeros((1, d_pad), jnp.float32)
        acc = lax.fori_loop(0, num, token_body, acc0)

        denom = jnp.maximum(num, 1).astype(jnp.float32)
        pooled_ref[pl.ds(bb, 1), :] = acc / denom   # mean after the reduction

    # --- Linear for the whole tile: (TB, D_pad) @ (D_pad, C_pad) + bias ---
    logits = jnp.dot(pooled_ref[...], fcwt_ref[...],
                     preferred_element_type=jnp.float32) + bias_ref[...]
    out_ref[...] = logits.astype(out_ref.dtype)


def text_classifier_forward(text, offsets, emb_w, fc_w, fc_b):
    """text: (N,) int token ids; offsets: (B,) int bag starts (sorted ascending)."""
    N = int(text.shape[0])
    B = int(offsets.shape[0])
    V, D = emb_w.shape
    C = fc_w.shape[0]

    D_pad = _round_up(D, 128)
    C_pad = _round_up(C, 128)
    B_pad = _round_up(B, TB)

    # index plumbing (plain JAX)
    ids = jnp.clip(text.astype(jnp.int32), 0, V - 1)                   # OOB-safe gather
    starts = offsets.astype(jnp.int32)
    ends = jnp.concatenate([starts[1:], jnp.array([N], jnp.int32)])
    lens = jnp.maximum(ends - starts, 0)                               # empty bags -> 0

    # pad bag metadata to a multiple of TB (padded bags have length 0)
    starts_p = jnp.zeros((B_pad,), jnp.int32).at[:B].set(starts)
    lens_p = jnp.zeros((B_pad,), jnp.int32).at[:B].set(lens)

    # lane-dense, pre-transposed parameters
    emb_pad = jnp.zeros((V, D_pad), jnp.float32).at[:, :D].set(emb_w.astype(jnp.float32))
    fcwt_pad = jnp.zeros((D_pad, C_pad), jnp.float32).at[:D, :C].set(
        fc_w.astype(jnp.float32).T)
    bias_pad = jnp.zeros((1, C_pad), jnp.float32).at[0, :C].set(fc_b.astype(jnp.float32))

    grid_spec = pltpu.PrefetchScalarGridSpec(
        num_scalar_prefetch=3,
        grid=(B_pad // TB,),
        in_specs=[
            pl.BlockSpec(memory_space=pl.ANY),                         # emb table stays in HBM
            pl.BlockSpec((D_pad, C_pad), lambda t, ids, st, ln: (0, 0)),
            pl.BlockSpec((1, C_pad), lambda t, ids, st, ln: (0, 0)),
        ],
        out_specs=pl.BlockSpec((TB, C_pad), lambda t, ids, st, ln: (t, 0)),
        scratch_shapes=[
            pltpu.VMEM((2, 1, D_pad), jnp.float32),                    # double-buffered row
            pltpu.SemaphoreType.DMA((2,)),
            pltpu.VMEM((TB, D_pad), jnp.float32),                      # pooled bags (tile)
        ],
    )

    out = pl.pallas_call(
        text_classifier_kernel,
        out_shape=jax.ShapeDtypeStruct((B_pad, C_pad), jnp.float32),
        grid_spec=grid_spec,
        compiler_params=pltpu.CompilerParams(
            dimension_semantics=("parallel",),
            vmem_limit_bytes=32 * 1024 * 1024,
        ),
    )(ids, starts_p, lens_p, emb_pad, fcwt_pad, bias_pad)

    return out[:B, :C]


def ref_forward(text, offsets, emb_w, fc_w, fc_b):
    """Pure-JAX reference matching torch EmbeddingBag(mode='mean') + Linear."""
    N = text.shape[0]
    ends = jnp.concatenate([offsets[1:], jnp.array([N], jnp.int32)])
    pooled = []
    for s, e in zip(list(offsets), list(ends)):
        pooled.append(jnp.mean(emb_w[text[int(s):int(e)]], axis=0))
    pooled = jnp.stack(pooled)
    return pooled @ fc_w.T + fc_b


if __name__ == "__main__":
    # Small, deterministic problem sizes.
    vocab_size = 64
    embed_dim = 32
    num_class = 8
    N = 24            # total number of tokens in the flattened batch
    B = 4             # number of bags (sentences)

    key = jax.random.PRNGKey(0)
    k_emb, k_fcw, k_text = jax.random.split(key, 3)

    # Matches TextClassifier.init_weights(): uniform(-0.5, 0.5), bias zero.
    initrange = 0.5
    emb_w = jax.random.uniform(k_emb, (vocab_size, embed_dim),
                               minval=-initrange, maxval=initrange, dtype=jnp.float32)
    fc_w = jax.random.uniform(k_fcw, (num_class, embed_dim),
                              minval=-initrange, maxval=initrange, dtype=jnp.float32)
    fc_b = jnp.zeros((num_class,), jnp.float32)

    text = jax.random.randint(k_text, (N,), 0, vocab_size, dtype=jnp.int32)
    offsets = jnp.array([0, 5, 11, 18], dtype=jnp.int32)   # B bags of lengths 5,6,7,6

    out = text_classifier_forward(text, offsets, emb_w, fc_w, fc_b)
    out = jax.block_until_ready(out)

    expected = ref_forward(text, offsets, emb_w, fc_w, fc_b)
    assert out.shape == (B, num_class)
    assert jnp.allclose(out, expected, atol=1e-4, rtol=1e-4), "mismatch vs reference"

    print("KERNEL_OK")
</pallas_src>

<mosaic_0001>
module attributes {stable_mosaic.version = 11 : i64} {
  func.func @text_classifier_kernel(%arg0: i32, %arg1: memref<24xi32, #tpu.memory_space<smem>>, %arg2: memref<8xi32, #tpu.memory_space<smem>>, %arg3: memref<8xi32, #tpu.memory_space<smem>>, %arg4: memref<64x128xf32, #tpu.memory_space<any>>, %arg5: memref<128x128xf32, #tpu.memory_space<vmem>>, %arg6: memref<1x128xf32, #tpu.memory_space<vmem>>, %arg7: memref<8x128xf32, #tpu.memory_space<vmem>>, %arg8: memref<2x1x128xf32, #tpu.memory_space<vmem>>, %arg9: memref<2x!tpu.dma_semaphore, #tpu.memory_space<semaphore_mem>>, %arg10: memref<8x128xf32, #tpu.memory_space<vmem>>) attributes {dimension_semantics = [#tpu.dimension_semantics<parallel>], iteration_bounds = array<i64: 1>, scalar_prefetch = 3 : i64, scratch_operands = 3 : i64, tpu.core_type = #tpu.core_type<tc>, window_params = [{}, {pipeline_mode = #tpu.pipeline_mode<synchronous>, transform_indices = @transform_1, window_bounds = array<i64: 128, 128>}, {pipeline_mode = #tpu.pipeline_mode<synchronous>, transform_indices = @transform_2, window_bounds = array<i64: 1, 128>}, {transform_indices = @transform_3, window_bounds = array<i64: 8, 128>}]} {
    %c8_i32 = arith.constant 8 : i32
    %0 = arith.muli %arg0, %c8_i32 : i32
    %c0_i32 = arith.constant 0 : i32
    %1 = arith.addi %0, %c0_i32 : i32
    %2 = arith.index_cast %1 : i32 to index
    %3 = memref.load %arg2[%2] : memref<8xi32, #tpu.memory_space<smem>>
    %4 = arith.index_cast %1 : i32 to index
    %5 = memref.load %arg3[%4] : memref<8xi32, #tpu.memory_space<smem>>
    %c0_i32_0 = arith.constant 0 : i32
    %6 = arith.cmpi sgt, %5, %c0_i32_0 : i32
    %7 = arith.extui %6 : i1 to i32
    %c0_i32_1 = arith.constant 0 : i32
    %8 = arith.cmpi ne, %7, %c0_i32_1 : i32
    scf.if %8 {
      %c23_i32 = arith.constant 23 : i32
      %151 = arith.minsi %3, %c23_i32 : i32
      %152 = arith.index_cast %151 : i32 to index
      %153 = memref.load %arg1[%152] : memref<24xi32, #tpu.memory_space<smem>>
      %c0_i32_71 = arith.constant 0 : i32
      %c0_i32_72 = arith.constant 0 : i32
      %c0_i32_73 = arith.constant 0 : i32
      %154 = tpu.memref_slice %arg4[%153, %c0_i32_73] : memref<64x128xf32, #tpu.memory_space<any>> -> memref<1x128xf32, #tpu.memory_space<any>>
      %c0_i32_74 = arith.constant 0 : i32
      %c0_i32_75 = arith.constant 0 : i32
      %155 = tpu.memref_slice %arg8[%c0_i32_71, %c0_i32_74, %c0_i32_75] : memref<2x1x128xf32, #tpu.memory_space<vmem>> -> memref<1x1x128xf32, #tpu.memory_space<vmem>>
      %156 = tpu.memref_squeeze %155 : memref<1x1x128xf32, #tpu.memory_space<vmem>> -> memref<1x128xf32, #tpu.memory_space<vmem>>
      %157 = tpu.memref_slice %arg9[%c0_i32_72] : memref<2x!tpu.dma_semaphore, #tpu.memory_space<semaphore_mem>> -> memref<1x!tpu.dma_semaphore, #tpu.memory_space<semaphore_mem>>
      %158 = tpu.memref_squeeze %157 : memref<1x!tpu.dma_semaphore, #tpu.memory_space<semaphore_mem>> -> memref<!tpu.dma_semaphore, #tpu.memory_space<semaphore_mem>>
      tpu.enqueue_dma source(%154 : memref<1x128xf32, #tpu.memory_space<any>>) target(%156 : memref<1x128xf32, #tpu.memory_space<vmem>>) target_semaphore(%158 : memref<!tpu.dma_semaphore, #tpu.memory_space<semaphore_mem>>)
    } else {
    }
    %cst = arith.constant 0.000000e+00 : f32
    %9 = vector.broadcast %cst : f32 to vector<1x128xf32>
    %c0_i32_2 = arith.constant 0 : i32
    %10 = arith.subi %5, %c0_i32_2 : i32
    %11 = arith.addi %c0_i32_2, %10 : i32
    %c1_i32 = arith.constant 1 : i32
    %12 = scf.for %arg11 = %c0_i32_2 to %11 step %c1_i32 iter_args(%arg12 = %9) -> (vector<1x128xf32>)  : i32 {
      %c2_i32_71 = arith.constant 2 : i32
      %151 = arith.remsi %arg11, %c2_i32_71 : i32
      %c0_i32_72 = arith.constant 0 : i32
      %c0_i32_73 = arith.constant 0 : i32
      %152 = tpu.memref_slice %arg4[%c0_i32_72, %c0_i32_73] : memref<64x128xf32, #tpu.memory_space<any>> -> memref<1x128xf32, #tpu.memory_space<any>>
      %c0_i32_74 = arith.constant 0 : i32
      %c0_i32_75 = arith.constant 0 : i32
      %153 = tpu.memref_slice %arg8[%151, %c0_i32_74, %c0_i32_75] : memref<2x1x128xf32, #tpu.memory_space<vmem>> -> memref<1x1x128xf32, #tpu.memory_space<vmem>>
      %154 = tpu.memref_squeeze %153 : memref<1x1x128xf32, #tpu.memory_space<vmem>> -> memref<1x128xf32, #tpu.memory_space<vmem>>
      %155 = tpu.memref_slice %arg9[%151] : memref<2x!tpu.dma_semaphore, #tpu.memory_space<semaphore_mem>> -> memref<1x!tpu.dma_semaphore, #tpu.memory_space<semaphore_mem>>
      %156 = tpu.memref_squeeze %155 : memref<1x!tpu.dma_semaphore, #tpu.memory_space<semaphore_mem>> -> memref<!tpu.dma_semaphore, #tpu.memory_space<semaphore_mem>>
      tpu.wait_dma2 semaphore(%156 : memref<!tpu.dma_semaphore, #tpu.memory_space<semaphore_mem>>) src(%152 : memref<1x128xf32, #tpu.memory_space<any>>) dst(%154 : memref<1x128xf32, #tpu.memory_space<vmem>>)
      %c1_i32_76 = arith.constant 1 : i32
      %157 = arith.addi %arg11, %c1_i32_76 : i32
      %158 = arith.cmpi slt, %157, %5 : i32
      %159 = arith.extui %158 : i1 to i32
      %c0_i32_77 = arith.constant 0 : i32
      %160 = arith.cmpi ne, %159, %c0_i32_77 : i32
      scf.if %160 {
        %165 = arith.addi %3, %arg11 : i32
        %c1_i32_80 = arith.constant 1 : i32
        %166 = arith.addi %165, %c1_i32_80 : i32
        %c23_i32 = arith.constant 23 : i32
        %167 = arith.minsi %166, %c23_i32 : i32
        %c1_i32_81 = arith.constant 1 : i32
        %168 = arith.subi %c1_i32_81, %151 : i32
        %169 = arith.index_cast %167 : i32 to index
        %170 = memref.load %arg1[%169] : memref<24xi32, #tpu.memory_space<smem>>
        %c0_i32_82 = arith.constant 0 : i32
        %171 = tpu.memref_slice %arg4[%170, %c0_i32_82] : memref<64x128xf32, #tpu.memory_space<any>> -> memref<1x128xf32, #tpu.memory_space<any>>
        %c0_i32_83 = arith.constant 0 : i32
        %c0_i32_84 = arith.constant 0 : i32
        %172 = tpu.memref_slice %arg8[%168, %c0_i32_83, %c0_i32_84] : memref<2x1x128xf32, #tpu.memory_space<vmem>> -> memref<1x1x128xf32, #tpu.memory_space<vmem>>
        %173 = tpu.memref_squeeze %172 : memref<1x1x128xf32, #tpu.memory_space<vmem>> -> memref<1x128xf32, #tpu.memory_space<vmem>>
        %174 = tpu.memref_slice %arg9[%168] : memref<2x!tpu.dma_semaphore, #tpu.memory_space<semaphore_mem>> -> memref<1x!tpu.dma_semaphore, #tpu.memory_space<semaphore_mem>>
        %175 = tpu.memref_squeeze %174 : memref<1x!tpu.dma_semaphore, #tpu.memory_space<semaphore_mem>> -> memref<!tpu.dma_semaphore, #tpu.memory_space<semaphore_mem>>
        tpu.enqueue_dma source(%171 : memref<1x128xf32, #tpu.memory_space<any>>) target(%173 : memref<1x128xf32, #tpu.memory_space<vmem>>) target_semaphore(%175 : memref<!tpu.dma_semaphore, #tpu.memory_space<semaphore_mem>>)
      } else {
      }
      %161 = arith.index_cast %151 : i32 to index
      %c0_78 = arith.constant 0 : index
      %c0_79 = arith.constant 0 : index
      %162 = vector.load %arg8[%161, %c0_78, %c0_79] : memref<2x1x128xf32, #tpu.memory_space<vmem>>, vector<1x1x128xf32>
      %163 = vector.shape_cast %162 : vector<1x1x128xf32> to vector<1x128xf32>
      %164 = arith.addf %arg12, %163 : vector<1x128xf32>
      scf.yield %164 : vector<1x128xf32>
    }
    %c1_i32_3 = arith.constant 1 : i32
    %13 = arith.maxsi %5, %c1_i32_3 : i32
    %14 = arith.sitofp %13 : i32 to f32
    %15 = vector.broadcast %14 : f32 to vector<1x128xf32>
    %16 = arith.divf %12, %15 : vector<1x128xf32>
    %c0 = arith.constant 0 : index
    %c0_4 = arith.constant 0 : index
    %17 = vector.load %arg10[%c0, %c0_4] : memref<8x128xf32, #tpu.memory_space<vmem>>, vector<1x128xf32>
    tpu.vector_store %arg10[%c0, %c0_4], %16 {strides = array<i32>} : memref<8x128xf32, #tpu.memory_space<vmem>>, vector<1x128xf32>,
    %c8_i32_5 = arith.constant 8 : i32
    %18 = arith.muli %arg0, %c8_i32_5 : i32
    %c1_i32_6 = arith.constant 1 : i32
    %19 = arith.addi %18, %c1_i32_6 : i32
    %20 = arith.index_cast %19 : i32 to index
    %21 = memref.load %arg2[%20] : memref<8xi32, #tpu.memory_space<smem>>
    %22 = arith.index_cast %19 : i32 to index
    %23 = memref.load %arg3[%22] : memref<8xi32, #tpu.memory_space<smem>>
    %c0_i32_7 = arith.constant 0 : i32
    %24 = arith.cmpi sgt, %23, %c0_i32_7 : i32
    %25 = arith.extui %24 : i1 to i32
    %c0_i32_8 = arith.constant 0 : i32
    %26 = arith.cmpi ne, %25, %c0_i32_8 : i32
    scf.if %26 {
      %c23_i32 = arith.constant 23 : i32
      %151 = arith.minsi %21, %c23_i32 : i32
      %152 = arith.index_cast %151 : i32 to index
      %153 = memref.load %arg1[%152] : memref<24xi32, #tpu.memory_space<smem>>
      %c0_i32_71 = arith.constant 0 : i32
      %c0_i32_72 = arith.constant 0 : i32
      %c0_i32_73 = arith.constant 0 : i32
      %154 = tpu.memref_slice %arg4[%153, %c0_i32_73] : memref<64x128xf32, #tpu.memory_space<any>> -> memref<1x128xf32, #tpu.memory_space<any>>
      %c0_i32_74 = arith.constant 0 : i32
      %c0_i32_75 = arith.constant 0 : i32
      %155 = tpu.memref_slice %arg8[%c0_i32_71, %c0_i32_74, %c0_i32_75] : memref<2x1x128xf32, #tpu.memory_space<vmem>> -> memref<1x1x128xf32, #tpu.memory_space<vmem>>
      %156 = tpu.memref_squeeze %155 : memref<1x1x128xf32, #tpu.memory_space<vmem>> -> memref<1x128xf32, #tpu.memory_space<vmem>>
      %157 = tpu.memref_slice %arg9[%c0_i32_72] : memref<2x!tpu.dma_semaphore, #tpu.memory_space<semaphore_mem>> -> memref<1x!tpu.dma_semaphore, #tpu.memory_space<semaphore_mem>>
      %158 = tpu.memref_squeeze %157 : memref<1x!tpu.dma_semaphore, #tpu.memory_space<semaphore_mem>> -> memref<!tpu.dma_semaphore, #tpu.memory_space<semaphore_mem>>
      tpu.enqueue_dma source(%154 : memref<1x128xf32, #tpu.memory_space<any>>) target(%156 : memref<1x128xf32, #tpu.memory_space<vmem>>) target_semaphore(%158 : memref<!tpu.dma_semaphore, #tpu.memory_space<semaphore_mem>>)
    } else {
    }
    %cst_9 = arith.constant 0.000000e+00 : f32
    %27 = vector.broadcast %cst_9 : f32 to vector<1x128xf32>
    %c0_i32_10 = arith.constant 0 : i32
    %28 = arith.subi %23, %c0_i32_10 : i32
    %29 = arith.addi %c0_i32_10, %28 : i32
    %c1_i32_11 = arith.constant 1 : i32
    %30 = scf.for %arg11 = %c0_i32_10 to %29 step %c1_i32_11 iter_args(%arg12 = %27) -> (vector<1x128xf32>)  : i32 {
      %c2_i32_71 = arith.constant 2 : i32
      %151 = arith.remsi %arg11, %c2_i32_71 : i32
      %c0_i32_72 = arith.constant 0 : i32
      %c0_i32_73 = arith.constant 0 : i32
      %152 = tpu.memref_slice %arg4[%c0_i32_72, %c0_i32_73] : memref<64x128xf32, #tpu.memory_space<any>> -> memref<1x128xf32, #tpu.memory_space<any>>
      %c0_i32_74 = arith.constant 0 : i32
      %c0_i32_75 = arith.constant 0 : i32
      %153 = tpu.memref_slice %arg8[%151, %c0_i32_74, %c0_i32_75] : memref<2x1x128xf32, #tpu.memory_space<vmem>> -> memref<1x1x128xf32, #tpu.memory_space<vmem>>
      %154 = tpu.memref_squeeze %153 : memref<1x1x128xf32, #tpu.memory_space<vmem>> -> memref<1x128xf32, #tpu.memory_space<vmem>>
      %155 = tpu.memref_slice %arg9[%151] : memref<2x!tpu.dma_semaphore, #tpu.memory_space<semaphore_mem>> -> memref<1x!tpu.dma_semaphore, #tpu.memory_space<semaphore_mem>>
      %156 = tpu.memref_squeeze %155 : memref<1x!tpu.dma_semaphore, #tpu.memory_space<semaphore_mem>> -> memref<!tpu.dma_semaphore, #tpu.memory_space<semaphore_mem>>
      tpu.wait_dma2 semaphore(%156 : memref<!tpu.dma_semaphore, #tpu.memory_space<semaphore_mem>>) src(%152 : memref<1x128xf32, #tpu.memory_space<any>>) dst(%154 : memref<1x128xf32, #tpu.memory_space<vmem>>)
      %c1_i32_76 = arith.constant 1 : i32
      %157 = arith.addi %arg11, %c1_i32_76 : i32
      %158 = arith.cmpi slt, %157, %23 : i32
      %159 = arith.extui %158 : i1 to i32
      %c0_i32_77 = arith.constant 0 : i32
      %160 = arith.cmpi ne, %159, %c0_i32_77 : i32
      scf.if %160 {
        %165 = arith.addi %21, %arg11 : i32
        %c1_i32_80 = arith.constant 1 : i32
        %166 = arith.addi %165, %c1_i32_80 : i32
        %c23_i32 = arith.constant 23 : i32
        %167 = arith.minsi %166, %c23_i32 : i32
        %c1_i32_81 = arith.constant 1 : i32
        %168 = arith.subi %c1_i32_81, %151 : i32
        %169 = arith.index_cast %167 : i32 to index
        %170 = memref.load %arg1[%169] : memref<24xi32, #tpu.memory_space<smem>>
        %c0_i32_82 = arith.constant 0 : i32
        %171 = tpu.memref_slice %arg4[%170, %c0_i32_82] : memref<64x128xf32, #tpu.memory_space<any>> -> memref<1x128xf32, #tpu.memory_space<any>>
        %c0_i32_83 = arith.constant 0 : i32
        %c0_i32_84 = arith.constant 0 : i32
        %172 = tpu.memref_slice %arg8[%168, %c0_i32_83, %c0_i32_84] : memref<2x1x128xf32, #tpu.memory_space<vmem>> -> memref<1x1x128xf32, #tpu.memory_space<vmem>>
        %173 = tpu.memref_squeeze %172 : memref<1x1x128xf32, #tpu.memory_space<vmem>> -> memref<1x128xf32, #tpu.memory_space<vmem>>
        %174 = tpu.memref_slice %arg9[%168] : memref<2x!tpu.dma_semaphore, #tpu.memory_space<semaphore_mem>> -> memref<1x!tpu.dma_semaphore, #tpu.memory_space<semaphore_mem>>
        %175 = tpu.memref_squeeze %174 : memref<1x!tpu.dma_semaphore, #tpu.memory_space<semaphore_mem>> -> memref<!tpu.dma_semaphore, #tpu.memory_space<semaphore_mem>>
        tpu.enqueue_dma source(%171 : memref<1x128xf32, #tpu.memory_space<any>>) target(%173 : memref<1x128xf32, #tpu.memory_space<vmem>>) target_semaphore(%175 : memref<!tpu.dma_semaphore, #tpu.memory_space<semaphore_mem>>)
      } else {
      }
      %161 = arith.index_cast %151 : i32 to index
      %c0_78 = arith.constant 0 : index
      %c0_79 = arith.constant 0 : index
      %162 = vector.load %arg8[%161, %c0_78, %c0_79] : memref<2x1x128xf32, #tpu.memory_space<vmem>>, vector<1x1x128xf32>
      %163 = vector.shape_cast %162 : vector<1x1x128xf32> to vector<1x128xf32>
      %164 = arith.addf %arg12, %163 : vector<1x128xf32>
      scf.yield %164 : vector<1x128xf32>
    }
    %c1_i32_12 = arith.constant 1 : i32
    %31 = arith.maxsi %23, %c1_i32_12 : i32
    %32 = arith.sitofp %31 : i32 to f32
    %33 = vector.broadcast %32 : f32 to vector<1x128xf32>
    %34 = arith.divf %30, %33 : vector<1x128xf32>
    %c1 = arith.constant 1 : index
    %c0_13 = arith.constant 0 : index
    %35 = vector.load %arg10[%c1, %c0_13] : memref<8x128xf32, #tpu.memory_space<vmem>>, vector<1x128xf32>
    tpu.vector_store %arg10[%c1, %c0_13], %34 {strides = array<i32>} : memref<8x128xf32, #tpu.memory_space<vmem>>, vector<1x128xf32>,
    %c8_i32_14 = arith.constant 8 : i32
    %36 = arith.muli %arg0, %c8_i32_14 : i32
    %c2_i32 = arith.constant 2 : i32
    %37 = arith.addi %36, %c2_i32 : i32
    %38 = arith.index_cast %37 : i32 to index
    %39 = memref.load %arg2[%38] : memref<8xi32, #tpu.memory_space<smem>>
    %40 = arith.index_cast %37 : i32 to index
    %41 = memref.load %arg3[%40] : memref<8xi32, #tpu.memory_space<smem>>
    %c0_i32_15 = arith.constant 0 : i32
    %42 = arith.cmpi sgt, %41, %c0_i32_15 : i32
    %43 = arith.extui %42 : i1 to i32
    %c0_i32_16 = arith.constant 0 : i32
    %44 = arith.cmpi ne, %43, %c0_i32_16 : i32
    scf.if %44 {
      %c23_i32 = arith.constant 23 : i32
      %151 = arith.minsi %39, %c23_i32 : i32
      %152 = arith.index_cast %151 : i32 to index
      %153 = memref.load %arg1[%152] : memref<24xi32, #tpu.memory_space<smem>>
      %c0_i32_71 = arith.constant 0 : i32
      %c0_i32_72 = arith.constant 0 : i32
      %c0_i32_73 = arith.constant 0 : i32
      %154 = tpu.memref_slice %arg4[%153, %c0_i32_73] : memref<64x128xf32, #tpu.memory_space<any>> -> memref<1x128xf32, #tpu.memory_space<any>>
      %c0_i32_74 = arith.constant 0 : i32
      %c0_i32_75 = arith.constant 0 : i32
      %155 = tpu.memref_slice %arg8[%c0_i32_71, %c0_i32_74, %c0_i32_75] : memref<2x1x128xf32, #tpu.memory_space<vmem>> -> memref<1x1x128xf32, #tpu.memory_space<vmem>>
      %156 = tpu.memref_squeeze %155 : memref<1x1x128xf32, #tpu.memory_space<vmem>> -> memref<1x128xf32, #tpu.memory_space<vmem>>
      %157 = tpu.memref_slice %arg9[%c0_i32_72] : memref<2x!tpu.dma_semaphore, #tpu.memory_space<semaphore_mem>> -> memref<1x!tpu.dma_semaphore, #tpu.memory_space<semaphore_mem>>
      %158 = tpu.memref_squeeze %157 : memref<1x!tpu.dma_semaphore, #tpu.memory_space<semaphore_mem>> -> memref<!tpu.dma_semaphore, #tpu.memory_space<semaphore_mem>>
      tpu.enqueue_dma source(%154 : memref<1x128xf32, #tpu.memory_space<any>>) target(%156 : memref<1x128xf32, #tpu.memory_space<vmem>>) target_semaphore(%158 : memref<!tpu.dma_semaphore, #tpu.memory_space<semaphore_mem>>)
    } else {
    }
    %cst_17 = arith.constant 0.000000e+00 : f32
    %45 = vector.broadcast %cst_17 : f32 to vector<1x128xf32>
    %c0_i32_18 = arith.constant 0 : i32
    %46 = arith.subi %41, %c0_i32_18 : i32
    %47 = arith.addi %c0_i32_18, %46 : i32
    %c1_i32_19 = arith.constant 1 : i32
    %48 = scf.for %arg11 = %c0_i32_18 to %47 step %c1_i32_19 iter_args(%arg12 = %45) -> (vector<1x128xf32>)  : i32 {
      %c2_i32_71 = arith.constant 2 : i32
      %151 = arith.remsi %arg11, %c2_i32_71 : i32
      %c0_i32_72 = arith.constant 0 : i32
      %c0_i32_73 = arith.constant 0 : i32
      %152 = tpu.memref_slice %arg4[%c0_i32_72, %c0_i32_73] : memref<64x128xf32, #tpu.memory_space<any>> -> memref<1x128xf32, #tpu.memory_space<any>>
      %c0_i32_74 = arith.constant 0 : i32
      %c0_i32_75 = arith.constant 0 : i32
      %153 = tpu.memref_slice %arg8[%151, %c0_i32_74, %c0_i32_75] : memref<2x1x128xf32, #tpu.memory_space<vmem>> -> memref<1x1x128xf32, #tpu.memory_space<vmem>>
      %154 = tpu.memref_squeeze %153 : memref<1x1x128xf32, #tpu.memory_space<vmem>> -> memref<1x128xf32, #tpu.memory_space<vmem>>
      %155 = tpu.memref_slice %arg9[%151] : memref<2x!tpu.dma_semaphore, #tpu.memory_space<semaphore_mem>> -> memref<1x!tpu.dma_semaphore, #tpu.memory_space<semaphore_mem>>
      %156 = tpu.memref_squeeze %155 : memref<1x!tpu.dma_semaphore, #tpu.memory_space<semaphore_mem>> -> memref<!tpu.dma_semaphore, #tpu.memory_space<semaphore_mem>>
      tpu.wait_dma2 semaphore(%156 : memref<!tpu.dma_semaphore, #tpu.memory_space<semaphore_mem>>) src(%152 : memref<1x128xf32, #tpu.memory_space<any>>) dst(%154 : memref<1x128xf32, #tpu.memory_space<vmem>>)
      %c1_i32_76 = arith.constant 1 : i32
      %157 = arith.addi %arg11, %c1_i32_76 : i32
      %158 = arith.cmpi slt, %157, %41 : i32
      %159 = arith.extui %158 : i1 to i32
      %c0_i32_77 = arith.constant 0 : i32
      %160 = arith.cmpi ne, %159, %c0_i32_77 : i32
      scf.if %160 {
        %165 = arith.addi %39, %arg11 : i32
        %c1_i32_80 = arith.constant 1 : i32
        %166 = arith.addi %165, %c1_i32_80 : i32
        %c23_i32 = arith.constant 23 : i32
        %167 = arith.minsi %166, %c23_i32 : i32
        %c1_i32_81 = arith.constant 1 : i32
        %168 = arith.subi %c1_i32_81, %151 : i32
        %169 = arith.index_cast %167 : i32 to index
        %170 = memref.load %arg1[%169] : memref<24xi32, #tpu.memory_space<smem>>
        %c0_i32_82 = arith.constant 0 : i32
        %171 = tpu.memref_slice %arg4[%170, %c0_i32_82] : memref<64x128xf32, #tpu.memory_space<any>> -> memref<1x128xf32, #tpu.memory_space<any>>
        %c0_i32_83 = arith.constant 0 : i32
        %c0_i32_84 = arith.constant 0 : i32
        %172 = tpu.memref_slice %arg8[%168, %c0_i32_83, %c0_i32_84] : memref<2x1x128xf32, #tpu.memory_space<vmem>> -> memref<1x1x128xf32, #tpu.memory_space<vmem>>
        %173 = tpu.memref_squeeze %172 : memref<1x1x128xf32, #tpu.memory_space<vmem>> -> memref<1x128xf32, #tpu.memory_space<vmem>>
        %174 = tpu.memref_slice %arg9[%168] : memref<2x!tpu.dma_semaphore, #tpu.memory_space<semaphore_mem>> -> memref<1x!tpu.dma_semaphore, #tpu.memory_space<semaphore_mem>>
        %175 = tpu.memref_squeeze %174 : memref<1x!tpu.dma_semaphore, #tpu.memory_space<semaphore_mem>> -> memref<!tpu.dma_semaphore, #tpu.memory_space<semaphore_mem>>
        tpu.enqueue_dma source(%171 : memref<1x128xf32, #tpu.memory_space<any>>) target(%173 : memref<1x128xf32, #tpu.memory_space<vmem>>) target_semaphore(%175 : memref<!tpu.dma_semaphore, #tpu.memory_space<semaphore_mem>>)
      } else {
      }
      %161 = arith.index_cast %151 : i32 to index
      %c0_78 = arith.constant 0 : index
      %c0_79 = arith.constant 0 : index
      %162 = vector.load %arg8[%161, %c0_78, %c0_79] : memref<2x1x128xf32, #tpu.memory_space<vmem>>, vector<1x1x128xf32>
      %163 = vector.shape_cast %162 : vector<1x1x128xf32> to vector<1x128xf32>
      %164 = arith.addf %arg12, %163 : vector<1x128xf32>
      scf.yield %164 : vector<1x128xf32>
    }
    %c1_i32_20 = arith.constant 1 : i32
    %49 = arith.maxsi %41, %c1_i32_20 : i32
    %50 = arith.sitofp %49 : i32 to f32
    %51 = vector.broadcast %50 : f32 to vector<1x128xf32>
    %52 = arith.divf %48, %51 : vector<1x128xf32>
    %c2 = arith.constant 2 : index
    %c0_21 = arith.constant 0 : index
    %53 = vector.load %arg10[%c2, %c0_21] : memref<8x128xf32, #tpu.memory_space<vmem>>, vector<1x128xf32>
    tpu.vector_store %arg10[%c2, %c0_21], %52 {strides = array<i32>} : memref<8x128xf32, #tpu.memory_space<vmem>>, vector<1x128xf32>,
    %c8_i32_22 = arith.constant 8 : i32
    %54 = arith.muli %arg0, %c8_i32_22 : i32
    %c3_i32 = arith.constant 3 : i32
    %55 = arith.addi %54, %c3_i32 : i32
    %56 = arith.index_cast %55 : i32 to index
    %57 = memref.load %arg2[%56] : memref<8xi32, #tpu.memory_space<smem>>
    %58 = arith.index_cast %55 : i32 to index
    %59 = memref.load %arg3[%58] : memref<8xi32, #tpu.memory_space<smem>>
    %c0_i32_23 = arith.constant 0 : i32
    %60 = arith.cmpi sgt, %59, %c0_i32_23 : i32
    %61 = arith.extui %60 : i1 to i32
    %c0_i32_24 = arith.constant 0 : i32
    %62 = arith.cmpi ne, %61, %c0_i32_24 : i32
    scf.if %62 {
      %c23_i32 = arith.constant 23 : i32
      %151 = arith.minsi %57, %c23_i32 : i32
      %152 = arith.index_cast %151 : i32 to index
      %153 = memref.load %arg1[%152] : memref<24xi32, #tpu.memory_space<smem>>
      %c0_i32_71 = arith.constant 0 : i32
      %c0_i32_72 = arith.constant 0 : i32
      %c0_i32_73 = arith.constant 0 : i32
      %154 = tpu.memref_slice %arg4[%153, %c0_i32_73] : memref<64x128xf32, #tpu.memory_space<any>> -> memref<1x128xf32, #tpu.memory_space<any>>
      %c0_i32_74 = arith.constant 0 : i32
      %c0_i32_75 = arith.constant 0 : i32
      %155 = tpu.memref_slice %arg8[%c0_i32_71, %c0_i32_74, %c0_i32_75] : memref<2x1x128xf32, #tpu.memory_space<vmem>> -> memref<1x1x128xf32, #tpu.memory_space<vmem>>
      %156 = tpu.memref_squeeze %155 : memref<1x1x128xf32, #tpu.memory_space<vmem>> -> memref<1x128xf32, #tpu.memory_space<vmem>>
      %157 = tpu.memref_slice %arg9[%c0_i32_72] : memref<2x!tpu.dma_semaphore, #tpu.memory_space<semaphore_mem>> -> memref<1x!tpu.dma_semaphore, #tpu.memory_space<semaphore_mem>>
      %158 = tpu.memref_squeeze %157 : memref<1x!tpu.dma_semaphore, #tpu.memory_space<semaphore_mem>> -> memref<!tpu.dma_semaphore, #tpu.memory_space<semaphore_mem>>
      tpu.enqueue_dma source(%154 : memref<1x128xf32, #tpu.memory_space<any>>) target(%156 : memref<1x128xf32, #tpu.memory_space<vmem>>) target_semaphore(%158 : memref<!tpu.dma_semaphore, #tpu.memory_space<semaphore_mem>>)
    } else {
    }
    %cst_25 = arith.constant 0.000000e+00 : f32
    %63 = vector.broadcast %cst_25 : f32 to vector<1x128xf32>
    %c0_i32_26 = arith.constant 0 : i32
    %64 = arith.subi %59, %c0_i32_26 : i32
    %65 = arith.addi %c0_i32_26, %64 : i32
    %c1_i32_27 = arith.constant 1 : i32
    %66 = scf.for %arg11 = %c0_i32_26 to %65 step %c1_i32_27 iter_args(%arg12 = %63) -> (vector<1x128xf32>)  : i32 {
      %c2_i32_71 = arith.constant 2 : i32
      %151 = arith.remsi %arg11, %c2_i32_71 : i32
      %c0_i32_72 = arith.constant 0 : i32
      %c0_i32_73 = arith.constant 0 : i32
      %152 = tpu.memref_slice %arg4[%c0_i32_72, %c0_i32_73] : memref<64x128xf32, #tpu.memory_space<any>> -> memref<1x128xf32, #tpu.memory_space<any>>
      %c0_i32_74 = arith.constant 0 : i32
      %c0_i32_75 = arith.constant 0 : i32
      %153 = tpu.memref_slice %arg8[%151, %c0_i32_74, %c0_i32_75] : memref<2x1x128xf32, #tpu.memory_space<vmem>> -> memref<1x1x128xf32, #tpu.memory_space<vmem>>
      %154 = tpu.memref_squeeze %153 : memref<1x1x128xf32, #tpu.memory_space<vmem>> -> memref<1x128xf32, #tpu.memory_space<vmem>>
      %155 = tpu.memref_slice %arg9[%151] : memref<2x!tpu.dma_semaphore, #tpu.memory_space<semaphore_mem>> -> memref<1x!tpu.dma_semaphore, #tpu.memory_space<semaphore_mem>>
      %156 = tpu.memref_squeeze %155 : memref<1x!tpu.dma_semaphore, #tpu.memory_space<semaphore_mem>> -> memref<!tpu.dma_semaphore, #tpu.memory_space<semaphore_mem>>
      tpu.wait_dma2 semaphore(%156 : memref<!tpu.dma_semaphore, #tpu.memory_space<semaphore_mem>>) src(%152 : memref<1x128xf32, #tpu.memory_space<any>>) dst(%154 : memref<1x128xf32, #tpu.memory_space<vmem>>)
      %c1_i32_76 = arith.constant 1 : i32
      %157 = arith.addi %arg11, %c1_i32_76 : i32
      %158 = arith.cmpi slt, %157, %59 : i32
      %159 = arith.extui %158 : i1 to i32
      %c0_i32_77 = arith.constant 0 : i32
      %160 = arith.cmpi ne, %159, %c0_i32_77 : i32
      scf.if %160 {
        %165 = arith.addi %57, %arg11 : i32
        %c1_i32_80 = arith.constant 1 : i32
        %166 = arith.addi %165, %c1_i32_80 : i32
        %c23_i32 = arith.constant 23 : i32
        %167 = arith.minsi %166, %c23_i32 : i32
        %c1_i32_81 = arith.constant 1 : i32
        %168 = arith.subi %c1_i32_81, %151 : i32
        %169 = arith.index_cast %167 : i32 to index
        %170 = memref.load %arg1[%169] : memref<24xi32, #tpu.memory_space<smem>>
        %c0_i32_82 = arith.constant 0 : i32
        %171 = tpu.memref_slice %arg4[%170, %c0_i32_82] : memref<64x128xf32, #tpu.memory_space<any>> -> memref<1x128xf32, #tpu.memory_space<any>>
        %c0_i32_83 = arith.constant 0 : i32
        %c0_i32_84 = arith.constant 0 : i32
        %172 = tpu.memref_slice %arg8[%168, %c0_i32_83, %c0_i32_84] : memref<2x1x128xf32, #tpu.memory_space<vmem>> -> memref<1x1x128xf32, #tpu.memory_space<vmem>>
        %173 = tpu.memref_squeeze %172 : memref<1x1x128xf32, #tpu.memory_space<vmem>> -> memref<1x128xf32, #tpu.memory_space<vmem>>
        %174 = tpu.memref_slice %arg9[%168] : memref<2x!tpu.dma_semaphore, #tpu.memory_space<semaphore_mem>> -> memref<1x!tpu.dma_semaphore, #tpu.memory_space<semaphore_mem>>
        %175 = tpu.memref_squeeze %174 : memref<1x!tpu.dma_semaphore, #tpu.memory_space<semaphore_mem>> -> memref<!tpu.dma_semaphore, #tpu.memory_space<semaphore_mem>>
        tpu.enqueue_dma source(%171 : memref<1x128xf32, #tpu.memory_space<any>>) target(%173 : memref<1x128xf32, #tpu.memory_space<vmem>>) target_semaphore(%175 : memref<!tpu.dma_semaphore, #tpu.memory_space<semaphore_mem>>)
      } else {
      }
      %161 = arith.index_cast %151 : i32 to index
      %c0_78 = arith.constant 0 : index
      %c0_79 = arith.constant 0 : index
      %162 = vector.load %arg8[%161, %c0_78, %c0_79] : memref<2x1x128xf32, #tpu.memory_space<vmem>>, vector<1x1x128xf32>
      %163 = vector.shape_cast %162 : vector<1x1x128xf32> to vector<1x128xf32>
      %164 = arith.addf %arg12, %163 : vector<1x128xf32>
      scf.yield %164 : vector<1x128xf32>
    }
    %c1_i32_28 = arith.constant 1 : i32
    %67 = arith.maxsi %59, %c1_i32_28 : i32
    %68 = arith.sitofp %67 : i32 to f32
    %69 = vector.broadcast %68 : f32 to vector<1x128xf32>
    %70 = arith.divf %66, %69 : vector<1x128xf32>
    %c3 = arith.constant 3 : index
    %c0_29 = arith.constant 0 : index
    %71 = vector.load %arg10[%c3, %c0_29] : memref<8x128xf32, #tpu.memory_space<vmem>>, vector<1x128xf32>
    tpu.vector_store %arg10[%c3, %c0_29], %70 {strides = array<i32>} : memref<8x128xf32, #tpu.memory_space<vmem>>, vector<1x128xf32>,
    %c8_i32_30 = arith.constant 8 : i32
    %72 = arith.muli %arg0, %c8_i32_30 : i32
    %c4_i32 = arith.constant 4 : i32
    %73 = arith.addi %72, %c4_i32 : i32
    %74 = arith.index_cast %73 : i32 to index
    %75 = memref.load %arg2[%74] : memref<8xi32, #tpu.memory_space<smem>>
    %76 = arith.index_cast %73 : i32 to index
    %77 = memref.load %arg3[%76] : memref<8xi32, #tpu.memory_space<smem>>
    %c0_i32_31 = arith.constant 0 : i32
    %78 = arith.cmpi sgt, %77, %c0_i32_31 : i32
    %79 = arith.extui %78 : i1 to i32
    %c0_i32_32 = arith.constant 0 : i32
    %80 = arith.cmpi ne, %79, %c0_i32_32 : i32
    scf.if %80 {
      %c23_i32 = arith.constant 23 : i32
      %151 = arith.minsi %75, %c23_i32 : i32
      %152 = arith.index_cast %151 : i32 to index
      %153 = memref.load %arg1[%152] : memref<24xi32, #tpu.memory_space<smem>>
      %c0_i32_71 = arith.constant 0 : i32
      %c0_i32_72 = arith.constant 0 : i32
      %c0_i32_73 = arith.constant 0 : i32
      %154 = tpu.memref_slice %arg4[%153, %c0_i32_73] : memref<64x128xf32, #tpu.memory_space<any>> -> memref<1x128xf32, #tpu.memory_space<any>>
      %c0_i32_74 = arith.constant 0 : i32
      %c0_i32_75 = arith.constant 0 : i32
      %155 = tpu.memref_slice %arg8[%c0_i32_71, %c0_i32_74, %c0_i32_75] : memref<2x1x128xf32, #tpu.memory_space<vmem>> -> memref<1x1x128xf32, #tpu.memory_space<vmem>>
      %156 = tpu.memref_squeeze %155 : memref<1x1x128xf32, #tpu.memory_space<vmem>> -> memref<1x128xf32, #tpu.memory_space<vmem>>
      %157 = tpu.memref_slice %arg9[%c0_i32_72] : memref<2x!tpu.dma_semaphore, #tpu.memory_space<semaphore_mem>> -> memref<1x!tpu.dma_semaphore, #tpu.memory_space<semaphore_mem>>
      %158 = tpu.memref_squeeze %157 : memref<1x!tpu.dma_semaphore, #tpu.memory_space<semaphore_mem>> -> memref<!tpu.dma_semaphore, #tpu.memory_space<semaphore_mem>>
      tpu.enqueue_dma source(%154 : memref<1x128xf32, #tpu.memory_space<any>>) target(%156 : memref<1x128xf32, #tpu.memory_space<vmem>>) target_semaphore(%158 : memref<!tpu.dma_semaphore, #tpu.memory_space<semaphore_mem>>)
    } else {
    }
    %cst_33 = arith.constant 0.000000e+00 : f32
    %81 = vector.broadcast %cst_33 : f32 to vector<1x128xf32>
    %c0_i32_34 = arith.constant 0 : i32
    %82 = arith.subi %77, %c0_i32_34 : i32
    %83 = arith.addi %c0_i32_34, %82 : i32
    %c1_i32_35 = arith.constant 1 : i32
    %84 = scf.for %arg11 = %c0_i32_34 to %83 step %c1_i32_35 iter_args(%arg12 = %81) -> (vector<1x128xf32>)  : i32 {
      %c2_i32_71 = arith.constant 2 : i32
      %151 = arith.remsi %arg11, %c2_i32_71 : i32
      %c0_i32_72 = arith.constant 0 : i32
      %c0_i32_73 = arith.constant 0 : i32
      %152 = tpu.memref_slice %arg4[%c0_i32_72, %c0_i32_73] : memref<64x128xf32, #tpu.memory_space<any>> -> memref<1x128xf32, #tpu.memory_space<any>>
      %c0_i32_74 = arith.constant 0 : i32
      %c0_i32_75 = arith.constant 0 : i32
      %153 = tpu.memref_slice %arg8[%151, %c0_i32_74, %c0_i32_75] : memref<2x1x128xf32, #tpu.memory_space<vmem>> -> memref<1x1x128xf32, #tpu.memory_space<vmem>>
      %154 = tpu.memref_squeeze %153 : memref<1x1x128xf32, #tpu.memory_space<vmem>> -> memref<1x128xf32, #tpu.memory_space<vmem>>
      %155 = tpu.memref_slice %arg9[%151] : memref<2x!tpu.dma_semaphore, #tpu.memory_space<semaphore_mem>> -> memref<1x!tpu.dma_semaphore, #tpu.memory_space<semaphore_mem>>
      %156 = tpu.memref_squeeze %155 : memref<1x!tpu.dma_semaphore, #tpu.memory_space<semaphore_mem>> -> memref<!tpu.dma_semaphore, #tpu.memory_space<semaphore_mem>>
      tpu.wait_dma2 semaphore(%156 : memref<!tpu.dma_semaphore, #tpu.memory_space<semaphore_mem>>) src(%152 : memref<1x128xf32, #tpu.memory_space<any>>) dst(%154 : memref<1x128xf32, #tpu.memory_space<vmem>>)
      %c1_i32_76 = arith.constant 1 : i32
      %157 = arith.addi %arg11, %c1_i32_76 : i32
      %158 = arith.cmpi slt, %157, %77 : i32
      %159 = arith.extui %158 : i1 to i32
      %c0_i32_77 = arith.constant 0 : i32
      %160 = arith.cmpi ne, %159, %c0_i32_77 : i32
      scf.if %160 {
        %165 = arith.addi %75, %arg11 : i32
        %c1_i32_80 = arith.constant 1 : i32
        %166 = arith.addi %165, %c1_i32_80 : i32
        %c23_i32 = arith.constant 23 : i32
        %167 = arith.minsi %166, %c23_i32 : i32
        %c1_i32_81 = arith.constant 1 : i32
        %168 = arith.subi %c1_i32_81, %151 : i32
        %169 = arith.index_cast %167 : i32 to index
        %170 = memref.load %arg1[%169] : memref<24xi32, #tpu.memory_space<smem>>
        %c0_i32_82 = arith.constant 0 : i32
        %171 = tpu.memref_slice %arg4[%170, %c0_i32_82] : memref<64x128xf32, #tpu.memory_space<any>> -> memref<1x128xf32, #tpu.memory_space<any>>
        %c0_i32_83 = arith.constant 0 : i32
        %c0_i32_84 = arith.constant 0 : i32
        %172 = tpu.memref_slice %arg8[%168, %c0_i32_83, %c0_i32_84] : memref<2x1x128xf32, #tpu.memory_space<vmem>> -> memref<1x1x128xf32, #tpu.memory_space<vmem>>
        %173 = tpu.memref_squeeze %172 : memref<1x1x128xf32, #tpu.memory_space<vmem>> -> memref<1x128xf32, #tpu.memory_space<vmem>>
        %174 = tpu.memref_slice %arg9[%168] : memref<2x!tpu.dma_semaphore, #tpu.memory_space<semaphore_mem>> -> memref<1x!tpu.dma_semaphore, #tpu.memory_space<semaphore_mem>>
        %175 = tpu.memref_squeeze %174 : memref<1x!tpu.dma_semaphore, #tpu.memory_space<semaphore_mem>> -> memref<!tpu.dma_semaphore, #tpu.memory_space<semaphore_mem>>
        tpu.enqueue_dma source(%171 : memref<1x128xf32, #tpu.memory_space<any>>) target(%173 : memref<1x128xf32, #tpu.memory_space<vmem>>) target_semaphore(%175 : memref<!tpu.dma_semaphore, #tpu.memory_space<semaphore_mem>>)
      } else {
      }
      %161 = arith.index_cast %151 : i32 to index
      %c0_78 = arith.constant 0 : index
      %c0_79 = arith.constant 0 : index
      %162 = vector.load %arg8[%161, %c0_78, %c0_79] : memref<2x1x128xf32, #tpu.memory_space<vmem>>, vector<1x1x128xf32>
      %163 = vector.shape_cast %162 : vector<1x1x128xf32> to vector<1x128xf32>
      %164 = arith.addf %arg12, %163 : vector<1x128xf32>
      scf.yield %164 : vector<1x128xf32>
    }
    %c1_i32_36 = arith.constant 1 : i32
    %85 = arith.maxsi %77, %c1_i32_36 : i32
    %86 = arith.sitofp %85 : i32 to f32
    %87 = vector.broadcast %86 : f32 to vector<1x128xf32>
    %88 = arith.divf %84, %87 : vector<1x128xf32>
    %c4 = arith.constant 4 : index
    %c0_37 = arith.constant 0 : index
    %89 = vector.load %arg10[%c4, %c0_37] : memref<8x128xf32, #tpu.memory_space<vmem>>, vector<1x128xf32>
    tpu.vector_store %arg10[%c4, %c0_37], %88 {strides = array<i32>} : memref<8x128xf32, #tpu.memory_space<vmem>>, vector<1x128xf32>,
    %c8_i32_38 = arith.constant 8 : i32
    %90 = arith.muli %arg0, %c8_i32_38 : i32
    %c5_i32 = arith.constant 5 : i32
    %91 = arith.addi %90, %c5_i32 : i32
    %92 = arith.index_cast %91 : i32 to index
    %93 = memref.load %arg2[%92] : memref<8xi32, #tpu.memory_space<smem>>
    %94 = arith.index_cast %91 : i32 to index
    %95 = memref.load %arg3[%94] : memref<8xi32, #tpu.memory_space<smem>>
    %c0_i32_39 = arith.constant 0 : i32
    %96 = arith.cmpi sgt, %95, %c0_i32_39 : i32
    %97 = arith.extui %96 : i1 to i32
    %c0_i32_40 = arith.constant 0 : i32
    %98 = arith.cmpi ne, %97, %c0_i32_40 : i32
    scf.if %98 {
      %c23_i32 = arith.constant 23 : i32
      %151 = arith.minsi %93, %c23_i32 : i32
      %152 = arith.index_cast %151 : i32 to index
      %153 = memref.load %arg1[%152] : memref<24xi32, #tpu.memory_space<smem>>
      %c0_i32_71 = arith.constant 0 : i32
      %c0_i32_72 = arith.constant 0 : i32
      %c0_i32_73 = arith.constant 0 : i32
      %154 = tpu.memref_slice %arg4[%153, %c0_i32_73] : memref<64x128xf32, #tpu.memory_space<any>> -> memref<1x128xf32, #tpu.memory_space<any>>
      %c0_i32_74 = arith.constant 0 : i32
      %c0_i32_75 = arith.constant 0 : i32
      %155 = tpu.memref_slice %arg8[%c0_i32_71, %c0_i32_74, %c0_i32_75] : memref<2x1x128xf32, #tpu.memory_space<vmem>> -> memref<1x1x128xf32, #tpu.memory_space<vmem>>
      %156 = tpu.memref_squeeze %155 : memref<1x1x128xf32, #tpu.memory_space<vmem>> -> memref<1x128xf32, #tpu.memory_space<vmem>>
      %157 = tpu.memref_slice %arg9[%c0_i32_72] : memref<2x!tpu.dma_semaphore, #tpu.memory_space<semaphore_mem>> -> memref<1x!tpu.dma_semaphore, #tpu.memory_space<semaphore_mem>>
      %158 = tpu.memref_squeeze %157 : memref<1x!tpu.dma_semaphore, #tpu.memory_space<semaphore_mem>> -> memref<!tpu.dma_semaphore, #tpu.memory_space<semaphore_mem>>
      tpu.enqueue_dma source(%154 : memref<1x128xf32, #tpu.memory_space<any>>) target(%156 : memref<1x128xf32, #tpu.memory_space<vmem>>) target_semaphore(%158 : memref<!tpu.dma_semaphore, #tpu.memory_space<semaphore_mem>>)
    } else {
    }
    %cst_41 = arith.constant 0.000000e+00 : f32
    %99 = vector.broadcast %cst_41 : f32 to vector<1x128xf32>
    %c0_i32_42 = arith.constant 0 : i32
    %100 = arith.subi %95, %c0_i32_42 : i32
    %101 = arith.addi %c0_i32_42, %100 : i32
    %c1_i32_43 = arith.constant 1 : i32
    %102 = scf.for %arg11 = %c0_i32_42 to %101 step %c1_i32_43 iter_args(%arg12 = %99) -> (vector<1x128xf32>)  : i32 {
      %c2_i32_71 = arith.constant 2 : i32
      %151 = arith.remsi %arg11, %c2_i32_71 : i32
      %c0_i32_72 = arith.constant 0 : i32
      %c0_i32_73 = arith.constant 0 : i32
      %152 = tpu.memref_slice %arg4[%c0_i32_72, %c0_i32_73] : memref<64x128xf32, #tpu.memory_space<any>> -> memref<1x128xf32, #tpu.memory_space<any>>
      %c0_i32_74 = arith.constant 0 : i32
      %c0_i32_75 = arith.constant 0 : i32
      %153 = tpu.memref_slice %arg8[%151, %c0_i32_74, %c0_i32_75] : memref<2x1x128xf32, #tpu.memory_space<vmem>> -> memref<1x1x128xf32, #tpu.memory_space<vmem>>
      %154 = tpu.memref_squeeze %153 : memref<1x1x128xf32, #tpu.memory_space<vmem>> -> memref<1x128xf32, #tpu.memory_space<vmem>>
      %155 = tpu.memref_slice %arg9[%151] : memref<2x!tpu.dma_semaphore, #tpu.memory_space<semaphore_mem>> -> memref<1x!tpu.dma_semaphore, #tpu.memory_space<semaphore_mem>>
      %156 = tpu.memref_squeeze %155 : memref<1x!tpu.dma_semaphore, #tpu.memory_space<semaphore_mem>> -> memref<!tpu.dma_semaphore, #tpu.memory_space<semaphore_mem>>
      tpu.wait_dma2 semaphore(%156 : memref<!tpu.dma_semaphore, #tpu.memory_space<semaphore_mem>>) src(%152 : memref<1x128xf32, #tpu.memory_space<any>>) dst(%154 : memref<1x128xf32, #tpu.memory_space<vmem>>)
      %c1_i32_76 = arith.constant 1 : i32
      %157 = arith.addi %arg11, %c1_i32_76 : i32
      %158 = arith.cmpi slt, %157, %95 : i32
      %159 = arith.extui %158 : i1 to i32
      %c0_i32_77 = arith.constant 0 : i32
      %160 = arith.cmpi ne, %159, %c0_i32_77 : i32
      scf.if %160 {
        %165 = arith.addi %93, %arg11 : i32
        %c1_i32_80 = arith.constant 1 : i32
        %166 = arith.addi %165, %c1_i32_80 : i32
        %c23_i32 = arith.constant 23 : i32
        %167 = arith.minsi %166, %c23_i32 : i32
        %c1_i32_81 = arith.constant 1 : i32
        %168 = arith.subi %c1_i32_81, %151 : i32
        %169 = arith.index_cast %167 : i32 to index
        %170 = memref.load %arg1[%169] : memref<24xi32, #tpu.memory_space<smem>>
        %c0_i32_82 = arith.constant 0 : i32
        %171 = tpu.memref_slice %arg4[%170, %c0_i32_82] : memref<64x128xf32, #tpu.memory_space<any>> -> memref<1x128xf32, #tpu.memory_space<any>>
        %c0_i32_83 = arith.constant 0 : i32
        %c0_i32_84 = arith.constant 0 : i32
        %172 = tpu.memref_slice %arg8[%168, %c0_i32_83, %c0_i32_84] : memref<2x1x128xf32, #tpu.memory_space<vmem>> -> memref<1x1x128xf32, #tpu.memory_space<vmem>>
        %173 = tpu.memref_squeeze %172 : memref<1x1x128xf32, #tpu.memory_space<vmem>> -> memref<1x128xf32, #tpu.memory_space<vmem>>
        %174 = tpu.memref_slice %arg9[%168] : memref<2x!tpu.dma_semaphore, #tpu.memory_space<semaphore_mem>> -> memref<1x!tpu.dma_semaphore, #tpu.memory_space<semaphore_mem>>
        %175 = tpu.memref_squeeze %174 : memref<1x!tpu.dma_semaphore, #tpu.memory_space<semaphore_mem>> -> memref<!tpu.dma_semaphore, #tpu.memory_space<semaphore_mem>>
        tpu.enqueue_dma source(%171 : memref<1x128xf32, #tpu.memory_space<any>>) target(%173 : memref<1x128xf32, #tpu.memory_space<vmem>>) target_semaphore(%175 : memref<!tpu.dma_semaphore, #tpu.memory_space<semaphore_mem>>)
      } else {
      }
      %161 = arith.index_cast %151 : i32 to index
      %c0_78 = arith.constant 0 : index
      %c0_79 = arith.constant 0 : index
      %162 = vector.load %arg8[%161, %c0_78, %c0_79] : memref<2x1x128xf32, #tpu.memory_space<vmem>>, vector<1x1x128xf32>
      %163 = vector.shape_cast %162 : vector<1x1x128xf32> to vector<1x128xf32>
      %164 = arith.addf %arg12, %163 : vector<1x128xf32>
      scf.yield %164 : vector<1x128xf32>
    }
    %c1_i32_44 = arith.constant 1 : i32
    %103 = arith.maxsi %95, %c1_i32_44 : i32
    %104 = arith.sitofp %103 : i32 to f32
    %105 = vector.broadcast %104 : f32 to vector<1x128xf32>
    %106 = arith.divf %102, %105 : vector<1x128xf32>
    %c5 = arith.constant 5 : index
    %c0_45 = arith.constant 0 : index
    %107 = vector.load %arg10[%c5, %c0_45] : memref<8x128xf32, #tpu.memory_space<vmem>>, vector<1x128xf32>
    tpu.vector_store %arg10[%c5, %c0_45], %106 {strides = array<i32>} : memref<8x128xf32, #tpu.memory_space<vmem>>, vector<1x128xf32>,
    %c8_i32_46 = arith.constant 8 : i32
    %108 = arith.muli %arg0, %c8_i32_46 : i32
    %c6_i32 = arith.constant 6 : i32
    %109 = arith.addi %108, %c6_i32 : i32
    %110 = arith.index_cast %109 : i32 to index
    %111 = memref.load %arg2[%110] : memref<8xi32, #tpu.memory_space<smem>>
    %112 = arith.index_cast %109 : i32 to index
    %113 = memref.load %arg3[%112] : memref<8xi32, #tpu.memory_space<smem>>
    %c0_i32_47 = arith.constant 0 : i32
    %114 = arith.cmpi sgt, %113, %c0_i32_47 : i32
    %115 = arith.extui %114 : i1 to i32
    %c0_i32_48 = arith.constant 0 : i32
    %116 = arith.cmpi ne, %115, %c0_i32_48 : i32
    scf.if %116 {
      %c23_i32 = arith.constant 23 : i32
      %151 = arith.minsi %111, %c23_i32 : i32
      %152 = arith.index_cast %151 : i32 to index
      %153 = memref.load %arg1[%152] : memref<24xi32, #tpu.memory_space<smem>>
      %c0_i32_71 = arith.constant 0 : i32
      %c0_i32_72 = arith.constant 0 : i32
      %c0_i32_73 = arith.constant 0 : i32
      %154 = tpu.memref_slice %arg4[%153, %c0_i32_73] : memref<64x128xf32, #tpu.memory_space<any>> -> memref<1x128xf32, #tpu.memory_space<any>>
      %c0_i32_74 = arith.constant 0 : i32
      %c0_i32_75 = arith.constant 0 : i32
      %155 = tpu.memref_slice %arg8[%c0_i32_71, %c0_i32_74, %c0_i32_75] : memref<2x1x128xf32, #tpu.memory_space<vmem>> -> memref<1x1x128xf32, #tpu.memory_space<vmem>>
      %156 = tpu.memref_squeeze %155 : memref<1x1x128xf32, #tpu.memory_space<vmem>> -> memref<1x128xf32, #tpu.memory_space<vmem>>
      %157 = tpu.memref_slice %arg9[%c0_i32_72] : memref<2x!tpu.dma_semaphore, #tpu.memory_space<semaphore_mem>> -> memref<1x!tpu.dma_semaphore, #tpu.memory_space<semaphore_mem>>
      %158 = tpu.memref_squeeze %157 : memref<1x!tpu.dma_semaphore, #tpu.memory_space<semaphore_mem>> -> memref<!tpu.dma_semaphore, #tpu.memory_space<semaphore_mem>>
      tpu.enqueue_dma source(%154 : memref<1x128xf32, #tpu.memory_space<any>>) target(%156 : memref<1x128xf32, #tpu.memory_space<vmem>>) target_semaphore(%158 : memref<!tpu.dma_semaphore, #tpu.memory_space<semaphore_mem>>)
    } else {
    }
    %cst_49 = arith.constant 0.000000e+00 : f32
    %117 = vector.broadcast %cst_49 : f32 to vector<1x128xf32>
    %c0_i32_50 = arith.constant 0 : i32
    %118 = arith.subi %113, %c0_i32_50 : i32
    %119 = arith.addi %c0_i32_50, %118 : i32
    %c1_i32_51 = arith.constant 1 : i32
    %120 = scf.for %arg11 = %c0_i32_50 to %119 step %c1_i32_51 iter_args(%arg12 = %117) -> (vector<1x128xf32>)  : i32 {
      %c2_i32_71 = arith.constant 2 : i32
      %151 = arith.remsi %arg11, %c2_i32_71 : i32
      %c0_i32_72 = arith.constant 0 : i32
      %c0_i32_73 = arith.constant 0 : i32
      %152 = tpu.memref_slice %arg4[%c0_i32_72, %c0_i32_73] : memref<64x128xf32, #tpu.memory_space<any>> -> memref<1x128xf32, #tpu.memory_space<any>>
      %c0_i32_74 = arith.constant 0 : i32
      %c0_i32_75 = arith.constant 0 : i32
      %153 = tpu.memref_slice %arg8[%151, %c0_i32_74, %c0_i32_75] : memref<2x1x128xf32, #tpu.memory_space<vmem>> -> memref<1x1x128xf32, #tpu.memory_space<vmem>>
      %154 = tpu.memref_squeeze %153 : memref<1x1x128xf32, #tpu.memory_space<vmem>> -> memref<1x128xf32, #tpu.memory_space<vmem>>
      %155 = tpu.memref_slice %arg9[%151] : memref<2x!tpu.dma_semaphore, #tpu.memory_space<semaphore_mem>> -> memref<1x!tpu.dma_semaphore, #tpu.memory_space<semaphore_mem>>
      %156 = tpu.memref_squeeze %155 : memref<1x!tpu.dma_semaphore, #tpu.memory_space<semaphore_mem>> -> memref<!tpu.dma_semaphore, #tpu.memory_space<semaphore_mem>>
      tpu.wait_dma2 semaphore(%156 : memref<!tpu.dma_semaphore, #tpu.memory_space<semaphore_mem>>) src(%152 : memref<1x128xf32, #tpu.memory_space<any>>) dst(%154 : memref<1x128xf32, #tpu.memory_space<vmem>>)
      %c1_i32_76 = arith.constant 1 : i32
      %157 = arith.addi %arg11, %c1_i32_76 : i32
      %158 = arith.cmpi slt, %157, %113 : i32
      %159 = arith.extui %158 : i1 to i32
      %c0_i32_77 = arith.constant 0 : i32
      %160 = arith.cmpi ne, %159, %c0_i32_77 : i32
      scf.if %160 {
        %165 = arith.addi %111, %arg11 : i32
        %c1_i32_80 = arith.constant 1 : i32
        %166 = arith.addi %165, %c1_i32_80 : i32
        %c23_i32 = arith.constant 23 : i32
        %167 = arith.minsi %166, %c23_i32 : i32
        %c1_i32_81 = arith.constant 1 : i32
        %168 = arith.subi %c1_i32_81, %151 : i32
        %169 = arith.index_cast %167 : i32 to index
        %170 = memref.load %arg1[%169] : memref<24xi32, #tpu.memory_space<smem>>
        %c0_i32_82 = arith.constant 0 : i32
        %171 = tpu.memref_slice %arg4[%170, %c0_i32_82] : memref<64x128xf32, #tpu.memory_space<any>> -> memref<1x128xf32, #tpu.memory_space<any>>
        %c0_i32_83 = arith.constant 0 : i32
        %c0_i32_84 = arith.constant 0 : i32
        %172 = tpu.memref_slice %arg8[%168, %c0_i32_83, %c0_i32_84] : memref<2x1x128xf32, #tpu.memory_space<vmem>> -> memref<1x1x128xf32, #tpu.memory_space<vmem>>
        %173 = tpu.memref_squeeze %172 : memref<1x1x128xf32, #tpu.memory_space<vmem>> -> memref<1x128xf32, #tpu.memory_space<vmem>>
        %174 = tpu.memref_slice %arg9[%168] : memref<2x!tpu.dma_semaphore, #tpu.memory_space<semaphore_mem>> -> memref<1x!tpu.dma_semaphore, #tpu.memory_space<semaphore_mem>>
        %175 = tpu.memref_squeeze %174 : memref<1x!tpu.dma_semaphore, #tpu.memory_space<semaphore_mem>> -> memref<!tpu.dma_semaphore, #tpu.memory_space<semaphore_mem>>
        tpu.enqueue_dma source(%171 : memref<1x128xf32, #tpu.memory_space<any>>) target(%173 : memref<1x128xf32, #tpu.memory_space<vmem>>) target_semaphore(%175 : memref<!tpu.dma_semaphore, #tpu.memory_space<semaphore_mem>>)
      } else {
      }
      %161 = arith.index_cast %151 : i32 to index
      %c0_78 = arith.constant 0 : index
      %c0_79 = arith.constant 0 : index
      %162 = vector.load %arg8[%161, %c0_78, %c0_79] : memref<2x1x128xf32, #tpu.memory_space<vmem>>, vector<1x1x128xf32>
      %163 = vector.shape_cast %162 : vector<1x1x128xf32> to vector<1x128xf32>
      %164 = arith.addf %arg12, %163 : vector<1x128xf32>
      scf.yield %164 : vector<1x128xf32>
    }
    %c1_i32_52 = arith.constant 1 : i32
    %121 = arith.maxsi %113, %c1_i32_52 : i32
    %122 = arith.sitofp %121 : i32 to f32
    %123 = vector.broadcast %122 : f32 to vector<1x128xf32>
    %124 = arith.divf %120, %123 : vector<1x128xf32>
    %c6 = arith.constant 6 : index
    %c0_53 = arith.constant 0 : index
    %125 = vector.load %arg10[%c6, %c0_53] : memref<8x128xf32, #tpu.memory_space<vmem>>, vector<1x128xf32>
    tpu.vector_store %arg10[%c6, %c0_53], %124 {strides = array<i32>} : memref<8x128xf32, #tpu.memory_space<vmem>>, vector<1x128xf32>,
    %c8_i32_54 = arith.constant 8 : i32
    %126 = arith.muli %arg0, %c8_i32_54 : i32
    %c7_i32 = arith.constant 7 : i32
    %127 = arith.addi %126, %c7_i32 : i32
    %128 = arith.index_cast %127 : i32 to index
    %129 = memref.load %arg2[%128] : memref<8xi32, #tpu.memory_space<smem>>
    %130 = arith.index_cast %127 : i32 to index
    %131 = memref.load %arg3[%130] : memref<8xi32, #tpu.memory_space<smem>>
    %c0_i32_55 = arith.constant 0 : i32
    %132 = arith.cmpi sgt, %131, %c0_i32_55 : i32
    %133 = arith.extui %132 : i1 to i32
    %c0_i32_56 = arith.constant 0 : i32
    %134 = arith.cmpi ne, %133, %c0_i32_56 : i32
    scf.if %134 {
      %c23_i32 = arith.constant 23 : i32
      %151 = arith.minsi %129, %c23_i32 : i32
      %152 = arith.index_cast %151 : i32 to index
      %153 = memref.load %arg1[%152] : memref<24xi32, #tpu.memory_space<smem>>
      %c0_i32_71 = arith.constant 0 : i32
      %c0_i32_72 = arith.constant 0 : i32
      %c0_i32_73 = arith.constant 0 : i32
      %154 = tpu.memref_slice %arg4[%153, %c0_i32_73] : memref<64x128xf32, #tpu.memory_space<any>> -> memref<1x128xf32, #tpu.memory_space<any>>
      %c0_i32_74 = arith.constant 0 : i32
      %c0_i32_75 = arith.constant 0 : i32
      %155 = tpu.memref_slice %arg8[%c0_i32_71, %c0_i32_74, %c0_i32_75] : memref<2x1x128xf32, #tpu.memory_space<vmem>> -> memref<1x1x128xf32, #tpu.memory_space<vmem>>
      %156 = tpu.memref_squeeze %155 : memref<1x1x128xf32, #tpu.memory_space<vmem>> -> memref<1x128xf32, #tpu.memory_space<vmem>>
      %157 = tpu.memref_slice %arg9[%c0_i32_72] : memref<2x!tpu.dma_semaphore, #tpu.memory_space<semaphore_mem>> -> memref<1x!tpu.dma_semaphore, #tpu.memory_space<semaphore_mem>>
      %158 = tpu.memref_squeeze %157 : memref<1x!tpu.dma_semaphore, #tpu.memory_space<semaphore_mem>> -> memref<!tpu.dma_semaphore, #tpu.memory_space<semaphore_mem>>
      tpu.enqueue_dma source(%154 : memref<1x128xf32, #tpu.memory_space<any>>) target(%156 : memref<1x128xf32, #tpu.memory_space<vmem>>) target_semaphore(%158 : memref<!tpu.dma_semaphore, #tpu.memory_space<semaphore_mem>>)
    } else {
    }
    %cst_57 = arith.constant 0.000000e+00 : f32
    %135 = vector.broadcast %cst_57 : f32 to vector<1x128xf32>
    %c0_i32_58 = arith.constant 0 : i32
    %136 = arith.subi %131, %c0_i32_58 : i32
    %137 = arith.addi %c0_i32_58, %136 : i32
    %c1_i32_59 = arith.constant 1 : i32
    %138 = scf.for %arg11 = %c0_i32_58 to %137 step %c1_i32_59 iter_args(%arg12 = %135) -> (vector<1x128xf32>)  : i32 {
      %c2_i32_71 = arith.constant 2 : i32
      %151 = arith.remsi %arg11, %c2_i32_71 : i32
      %c0_i32_72 = arith.constant 0 : i32
      %c0_i32_73 = arith.constant 0 : i32
      %152 = tpu.memref_slice %arg4[%c0_i32_72, %c0_i32_73] : memref<64x128xf32, #tpu.memory_space<any>> -> memref<1x128xf32, #tpu.memory_space<any>>
      %c0_i32_74 = arith.constant 0 : i32
      %c0_i32_75 = arith.constant 0 : i32
      %153 = tpu.memref_slice %arg8[%151, %c0_i32_74, %c0_i32_75] : memref<2x1x128xf32, #tpu.memory_space<vmem>> -> memref<1x1x128xf32, #tpu.memory_space<vmem>>
      %154 = tpu.memref_squeeze %153 : memref<1x1x128xf32, #tpu.memory_space<vmem>> -> memref<1x128xf32, #tpu.memory_space<vmem>>
      %155 = tpu.memref_slice %arg9[%151] : memref<2x!tpu.dma_semaphore, #tpu.memory_space<semaphore_mem>> -> memref<1x!tpu.dma_semaphore, #tpu.memory_space<semaphore_mem>>
      %156 = tpu.memref_squeeze %155 : memref<1x!tpu.dma_semaphore, #tpu.memory_space<semaphore_mem>> -> memref<!tpu.dma_semaphore, #tpu.memory_space<semaphore_mem>>
      tpu.wait_dma2 semaphore(%156 : memref<!tpu.dma_semaphore, #tpu.memory_space<semaphore_mem>>) src(%152 : memref<1x128xf32, #tpu.memory_space<any>>) dst(%154 : memref<1x128xf32, #tpu.memory_space<vmem>>)
      %c1_i32_76 = arith.constant 1 : i32
      %157 = arith.addi %arg11, %c1_i32_76 : i32
      %158 = arith.cmpi slt, %157, %131 : i32
      %159 = arith.extui %158 : i1 to i32
      %c0_i32_77 = arith.constant 0 : i32
      %160 = arith.cmpi ne, %159, %c0_i32_77 : i32
      scf.if %160 {
        %165 = arith.addi %129, %arg11 : i32
        %c1_i32_80 = arith.constant 1 : i32
        %166 = arith.addi %165, %c1_i32_80 : i32
        %c23_i32 = arith.constant 23 : i32
        %167 = arith.minsi %166, %c23_i32 : i32
        %c1_i32_81 = arith.constant 1 : i32
        %168 = arith.subi %c1_i32_81, %151 : i32
        %169 = arith.index_cast %167 : i32 to index
        %170 = memref.load %arg1[%169] : memref<24xi32, #tpu.memory_space<smem>>
        %c0_i32_82 = arith.constant 0 : i32
        %171 = tpu.memref_slice %arg4[%170, %c0_i32_82] : memref<64x128xf32, #tpu.memory_space<any>> -> memref<1x128xf32, #tpu.memory_space<any>>
        %c0_i32_83 = arith.constant 0 : i32
        %c0_i32_84 = arith.constant 0 : i32
        %172 = tpu.memref_slice %arg8[%168, %c0_i32_83, %c0_i32_84] : memref<2x1x128xf32, #tpu.memory_space<vmem>> -> memref<1x1x128xf32, #tpu.memory_space<vmem>>
        %173 = tpu.memref_squeeze %172 : memref<1x1x128xf32, #tpu.memory_space<vmem>> -> memref<1x128xf32, #tpu.memory_space<vmem>>
        %174 = tpu.memref_slice %arg9[%168] : memref<2x!tpu.dma_semaphore, #tpu.memory_space<semaphore_mem>> -> memref<1x!tpu.dma_semaphore, #tpu.memory_space<semaphore_mem>>
        %175 = tpu.memref_squeeze %174 : memref<1x!tpu.dma_semaphore, #tpu.memory_space<semaphore_mem>> -> memref<!tpu.dma_semaphore, #tpu.memory_space<semaphore_mem>>
        tpu.enqueue_dma source(%171 : memref<1x128xf32, #tpu.memory_space<any>>) target(%173 : memref<1x128xf32, #tpu.memory_space<vmem>>) target_semaphore(%175 : memref<!tpu.dma_semaphore, #tpu.memory_space<semaphore_mem>>)
      } else {
      }
      %161 = arith.index_cast %151 : i32 to index
      %c0_78 = arith.constant 0 : index
      %c0_79 = arith.constant 0 : index
      %162 = vector.load %arg8[%161, %c0_78, %c0_79] : memref<2x1x128xf32, #tpu.memory_space<vmem>>, vector<1x1x128xf32>
      %163 = vector.shape_cast %162 : vector<1x1x128xf32> to vector<1x128xf32>
      %164 = arith.addf %arg12, %163 : vector<1x128xf32>
      scf.yield %164 : vector<1x128xf32>
    }
    %c1_i32_60 = arith.constant 1 : i32
    %139 = arith.maxsi %131, %c1_i32_60 : i32
    %140 = arith.sitofp %139 : i32 to f32
    %141 = vector.broadcast %140 : f32 to vector<1x128xf32>
    %142 = arith.divf %138, %141 : vector<1x128xf32>
    %c7 = arith.constant 7 : index
    %c0_61 = arith.constant 0 : index
    %143 = vector.load %arg10[%c7, %c0_61] : memref<8x128xf32, #tpu.memory_space<vmem>>, vector<1x128xf32>
    tpu.vector_store %arg10[%c7, %c0_61], %142 {strides = array<i32>} : memref<8x128xf32, #tpu.memory_space<vmem>>, vector<1x128xf32>,
    %c0_62 = arith.constant 0 : index
    %c0_63 = arith.constant 0 : index
    %144 = vector.load %arg10[%c0_62, %c0_63] : memref<8x128xf32, #tpu.memory_space<vmem>>, vector<8x128xf32>
    %c0_64 = arith.constant 0 : index
    %c0_65 = arith.constant 0 : index
    %145 = vector.load %arg5[%c0_64, %c0_65] : memref<128x128xf32, #tpu.memory_space<vmem>>, vector<128x128xf32>
    %cst_66 = arith.constant dense<0.000000e+00> : vector<8x128xf32>
    %146 = tpu.matmul %144, %145, %cst_66 {dimension_numbers = #tpu.dot_dimension_numbers<[1], [0], [0], [1], [0, 0, 1, 1], [], []>} : vector<8x128xf32>, vector<128x128xf32>, vector<8x128xf32> -> vector<8x128xf32>
    %c0_67 = arith.constant 0 : index
    %c0_68 = arith.constant 0 : index
    %147 = vector.load %arg6[%c0_67, %c0_68] : memref<1x128xf32, #tpu.memory_space<vmem>>, vector<1x128xf32>
    %148 = vector.broadcast %147 : vector<1x128xf32> to vector<8x128xf32>
    %149 = arith.addf %146, %148 : vector<8x128xf32>
    %c0_69 = arith.constant 0 : index
    %c0_70 = arith.constant 0 : index
    %150 = vector.load %arg7[%c0_69, %c0_70] : memref<8x128xf32, #tpu.memory_space<vmem>>, vector<8x128xf32>
    tpu.vector_store %arg7[%c0_69, %c0_70], %149 {strides = array<i32>} : memref<8x128xf32, #tpu.memory_space<vmem>>, vector<8x128xf32>,
    return
  }
  func.func @transform_1(%arg0: i32, %arg1: memref<24xi32, #tpu.memory_space<smem>>, %arg2: memref<8xi32, #tpu.memory_space<smem>>, %arg3: memref<8xi32, #tpu.memory_space<smem>>) -> (i32, i32) {
    %c0_i32 = arith.constant 0 : i32
    %c0_i32_0 = arith.constant 0 : i32
    %c0_i32_1 = arith.constant 0 : i32
    return %c0_i32, %c0_i32_0 : i32, i32
  }
  func.func @transform_2(%arg0: i32, %arg1: memref<24xi32, #tpu.memory_space<smem>>, %arg2: memref<8xi32, #tpu.memory_space<smem>>, %arg3: memref<8xi32, #tpu.memory_space<smem>>) -> (i32, i32) {
    %c0_i32 = arith.constant 0 : i32
    %c0_i32_0 = arith.constant 0 : i32
    %c0_i32_1 = arith.constant 0 : i32
    return %c0_i32, %c0_i32_0 : i32, i32
  }
  func.func @transform_3(%arg0: i32, %arg1: memref<24xi32, #tpu.memory_space<smem>>, %arg2: memref<8xi32, #tpu.memory_space<smem>>, %arg3: memref<8xi32, #tpu.memory_space<smem>>) -> (i32, i32) {
    %c0_i32 = arith.constant 0 : i32
    %c0_i32_0 = arith.constant 0 : i32
    return %arg0, %c0_i32 : i32, i32
  }
}

</mosaic_0001>

<llo_original>
// kernel: tpu_custom_call.1
$region0: #{tpu_custom_call.1}
  #allocation0 [shape = 'u32[]', space=smem, size = 0x4, offset = 0x4, fixed_abs, tag = 'smem constant byte address 0x4 - core index']
  #allocation1 [shape = 'u32[144,128]{1,0:T(1,128)}', space=vmem, size = 0x12000, scoped, tag = 'internal scratch']
  #allocation2 [shape = 'f32[2,1,128]{2,1,0:T(1,128)}', space=vmem, size = 0x400, scoped, tag = 'scratch operand']
  #allocation3 [shape = 's32[2]{0}', space=sflag, size = 0x8, scoped, tag = 'scratch operand']
  #allocation4 [shape = 'f32[8,128]{1,0:T(8,128)}', space=vmem, size = 0x1000, scoped, tag = 'scratch operand']
  #allocation5 [shape = 's32[1]{0}', space=sflag, size = 0x4, scoped, tag = 'scoped memory for tpu_custom_call.1']
  #allocation6 [shape = 'u8[512]{0}', space=smem, size = 0x200, scoped, tag = 'prefetched SMEM operand 0']
  #allocation7 [shape = 'u8[512]{0}', space=smem, size = 0x200, scoped, tag = 'prefetched SMEM operand 1']
  #allocation8 [shape = 'u8[512]{0}', space=smem, size = 0x200, scoped, tag = 'prefetched SMEM operand 2']
  #allocation13 [shape = 's32[]', space=sflag, size = 0x4, offset = 0, fixed_abs, tag = 'sflag constant byte address 0x0 - dummy sync flag']
  #allocation14 [shape = 's32[]', space=sflag, size = 0x4, offset = 0, fixed_abs, tag = 'sflag constant byte address 0x0 - dummy sync flag']
  #allocation15 [shape = 'u32[]', space=smem, size = 0x4, offset = 0x44, fixed_abs, tag = 'smem constant byte address 0x44 - assertion arg 0']
  #allocation16 [shape = 'u32[]', space=smem, size = 0x4, offset = 0x48, fixed_abs, tag = 'smem constant byte address 0x48 - assertion arg 1']
  #allocation17 [shape = 's32[]', space=sflag, size = 0x4, offset = 0, fixed_abs, tag = 'sflag constant byte address 0x0 - dummy sync flag']
  #allocation18 [shape = 's32[]', space=sflag, size = 0x4, offset = 0, fixed_abs, tag = 'sflag constant byte address 0x0 - dummy sync flag']
  #allocation19 [shape = 's32[]', space=sflag, size = 0x4, offset = 0, fixed_abs, tag = 'sflag constant byte address 0x0 - dummy sync flag']
  #allocation20 [shape = 's32[]', space=sflag, size = 0x4, offset = 0, fixed_abs, tag = 'sflag constant byte address 0x0 - dummy sync flag']
  #allocation21 [shape = 's32[]', space=sflag, size = 0x4, offset = 0, fixed_abs, tag = 'sflag constant byte address 0x0 - dummy sync flag']
  #allocation22 [shape = 's32[]', space=sflag, size = 0x4, offset = 0, fixed_abs, tag = 'sflag constant byte address 0x0 - dummy sync flag']
  #allocation23 [shape = 's32[]', space=sflag, size = 0x4, offset = 0, fixed_abs, tag = 'sflag constant byte address 0x0 - dummy sync flag']
  #allocation24 [shape = 's32[]', space=sflag, size = 0x4, offset = 0, fixed_abs, tag = 'sflag constant byte address 0x0 - dummy sync flag']
  #allocation25 [shape = 's32[]', space=sflag, size = 0x4, offset = 0, fixed_abs, tag = 'sflag constant byte address 0x0 - dummy sync flag']
  #allocation26 [shape = 's32[]', space=sflag, size = 0x4, offset = 0, fixed_abs, tag = 'sflag constant byte address 0x0 - dummy sync flag']
  #allocation27 [shape = 's32[]', space=sflag, size = 0x4, offset = 0, fixed_abs, tag = 'sflag constant byte address 0x0 - dummy sync flag']
  #allocation28 [shape = 's32[]', space=sflag, size = 0x4, offset = 0, fixed_abs, tag = 'sflag constant byte address 0x0 - dummy sync flag']
  #allocation29 [shape = 's32[]', space=sflag, size = 0x4, offset = 0, fixed_abs, tag = 'sflag constant byte address 0x0 - dummy sync flag']
  #allocation30 [shape = 's32[]', space=sflag, size = 0x4, offset = 0, fixed_abs, tag = 'sflag constant byte address 0x0 - dummy sync flag']
  #allocation31 [shape = 's32[]', space=sflag, size = 0x4, offset = 0, fixed_abs, tag = 'sflag constant byte address 0x0 - dummy sync flag']
  #allocation32 [shape = 's32[]', space=sflag, size = 0x4, offset = 0, fixed_abs, tag = 'sflag constant byte address 0x0 - dummy sync flag']
  #allocation33 [shape = 's32[]', space=sflag, size = 0x4, offset = 0, fixed_abs, tag = 'sflag constant byte address 0x0 - dummy sync flag']
  #allocation34 [shape = 's32[]', space=sflag, size = 0x4, offset = 0, fixed_abs, tag = 'sflag constant byte address 0x0 - dummy sync flag']
  #allocation35 [shape = 's32[]', space=sflag, size = 0x4, offset = 0, fixed_abs, tag = 'sflag constant byte address 0x0 - dummy sync flag']
  #allocation36 [shape = 's32[]', space=sflag, size = 0x4, offset = 0, fixed_abs, tag = 'sflag constant byte address 0x0 - dummy sync flag']
  #allocation37 [shape = 's32[]', space=sflag, size = 0x4, offset = 0, fixed_abs, tag = 'sflag constant byte address 0x0 - dummy sync flag']
  #allocation38 [shape = 's32[]', space=sflag, size = 0x4, offset = 0, fixed_abs, tag = 'sflag constant byte address 0x0 - dummy sync flag']
  #allocation39 [shape = 's32[]', space=sflag, size = 0x4, offset = 0, fixed_abs, tag = 'sflag constant byte address 0x0 - dummy sync flag']
  #allocation40 [shape = 's32[]', space=sflag, size = 0x4, offset = 0, fixed_abs, tag = 'sflag constant byte address 0x0 - dummy sync flag']
  #allocation41 [shape = 's32[]', space=sflag, size = 0x4, offset = 0, fixed_abs, tag = 'sflag constant byte address 0x0 - dummy sync flag']
  #allocation42 [shape = 's32[]', space=sflag, size = 0x4, offset = 0, fixed_abs, tag = 'sflag constant byte address 0x0 - dummy sync flag']
  #allocation43 [shape = 's32[]', space=sflag, size = 0x4, offset = 0, fixed_abs, tag = 'sflag constant byte address 0x0 - dummy sync flag']
  #allocation44 [shape = 's32[]', space=sflag, size = 0x4, offset = 0, fixed_abs, tag = 'sflag constant byte address 0x0 - dummy sync flag']
  #allocation45 [shape = 's32[]', space=sflag, size = 0x4, offset = 0, fixed_abs, tag = 'sflag constant byte address 0x0 - dummy sync flag']
  #allocation46 [shape = 's32[]', space=sflag, size = 0x4, offset = 0, fixed_abs, tag = 'sflag constant byte address 0x0 - dummy sync flag']
  %s0 = inlined_call_operand.hbm [shape: s32[24], index: 0, kind: input, shape index: {}]
  %s1 = inlined_call_operand.vmem [shape: s32[8], index: 1, kind: input, shape index: {}]
  %s2 = inlined_call_operand.vmem [shape: s32[8], index: 2, kind: input, shape index: {}]
  %s3 = inlined_call_operand.hbm [shape: f32[64,128], index: 3, kind: input, shape index: {}]
  %s4 = inlined_call_operand.hbm [shape: f32[128,128], index: 4, kind: input, shape index: {}]
  %s5 = inlined_call_operand.vmem [shape: f32[1,128], index: 5, kind: input, shape index: {}]
  %s6 = inlined_call_operand.hbm [shape: f32[8,128], index: 6, kind: output, shape index: {}]
  %s7 = sld [smem:[#allocation0]]
  $region206: #{tpu_custom_call.1} parent=0
    _
  %s9 = ssub.s32 1, %s7
  %s10 = scalar_select 0, %s9, %s7
  %12 = dma.hbm_to_smem %s0, 16, [#allocation6], [#allocation5]
  %s13 = sshll.u32 %s1, 4
  %s14 = int_to_ptr.vmem [resolvable:$true] %s13
  %16 = dma.vmem_to_smem %s14, 16, [#allocation7], [#allocation5]
  %s17 = sshll.u32 %s2, 4
  %s18 = int_to_ptr.vmem [resolvable:$true] %s17
  %20 = dma.vmem_to_smem %s18, 16, [#allocation8], [#allocation5]
  %21 = dma.done [#allocation5], 48
  %22 = sfence
  $region1: #{tpu_custom_call.1} parent=0
    #allocation9 [shape = 'u8[65536]{0}', space=vmem, size = 0x10000, scoped, tag = 'input window, operand 4, single buffered']
    #allocation10 [shape = 's32[1]{0}', space=sflag, size = 0x4, scoped, tag = 'scoped memory for tpu_custom_call.1']
    #allocation11 [shape = 's32[1]{0}', space=sflag, size = 0x4, scoped, tag = 'scoped memory for tpu_custom_call.1']
    #allocation12 [shape = 'u8[4096]{0}', space=vmem, size = 0x1000, scoped, tag = 'output window, operand 0, single buffered']
    %23 = vsyncpa [#allocation10], 0
    %24 = vsyncpa [#allocation11], 0
    // Predicated region
    $region2: #{tpu_custom_call.1} parent=1 // pred_check
      _
    $region3: #{tpu_custom_call.1} parent=1 // pred_check_branch
      %26 = sbr.rel (0) target = $region5
    $region4: #{tpu_custom_call.1} parent=1 // pred_region
      %s28 = ssub.s32 2048, 2048
      %29 = vsyncadd [#allocation10], %s28
      %s30 = sshll.u32 [#allocation9], 4
      %s31 = int_to_ptr.vmem [resolvable:$true] %s30
      %36 = dma.hbm_to_vmem [thread:$0]  %s4, 2048, %s31, [#allocation10], 128, 128, 8
    $region5: #{tpu_custom_call.1} parent=1 // pred_fallthru
      _
    // Predicated region
    $region6: #{tpu_custom_call.1} parent=1 // pred_check
      _
    $region7: #{tpu_custom_call.1} parent=1 // pred_check_branch
      %38 = sbr.rel (0) target = $region9
    $region8: #{tpu_custom_call.1} parent=1 // pred_region
      _
    $region9: #{tpu_custom_call.1} parent=1 // pred_fallthru
      _
    // Predicated region
    $region10: #{tpu_custom_call.1} parent=1 // pred_check
      _
    $region11: #{tpu_custom_call.1} parent=1 // pred_check_branch
      %40 = sbr.rel (0) target = $region13
    $region12: #{tpu_custom_call.1} parent=1 // pred_region
      %41 = dma.done [#allocation10], 2048
    $region13: #{tpu_custom_call.1} parent=1 // pred_fallthru
      _
    %s42 = smul.u32 0, 8
    %s43 = sld [smem:[#allocation7 + %s42]]
    %s44 = sld [smem:[#allocation8 + %s42]]
    %p45 = scmp.gt.s32.totalorder %s44, 0
    // Predicated region
    $region14: #{tpu_custom_call.1} parent=1 // pred_check
      %p46 = pneg %p45
    $region15: #{tpu_custom_call.1} parent=1 // pred_check_branch
      %48 = sbr.rel (%p46) target = $region17
    $region16: #{tpu_custom_call.1} parent=1 // pred_region
      %p49 = scmp.lt.s32.totalorder %s43, 23
      %s50 = scalar_select %p49, %s43, 23
      %s51 = sld [smem:[#allocation6 + %s50]]
      %s52 = smul.addr %s51, 16
      %s53 = scalar_lea.hbm %s3, %s52
      // Predicated region
      $region18: #{tpu_custom_call.1} parent=16 // pred_check
        _
      $region19: #{tpu_custom_call.1} parent=16 // pred_check_branch
        %55 = sbr.rel target = $region21
      $region20: #{tpu_custom_call.1} parent=16 // pred_region
        %56 = sst [smem:[#allocation15]] [#allocation14]
        %57 = sst [smem:[#allocation16]] [#allocation13]
      $region21: #{tpu_custom_call.1} parent=16 // pred_fallthru
        _
      %59 = shalt.err (0)
      %s61 = sshll.u32 [#allocation2], 4
      %s62 = int_to_ptr.vmem [resolvable:$true] %s61
      %64 = dma.hbm_to_vmem [thread:$0]  %s53, 16, %s62, [#allocation3]
    $region17: #{tpu_custom_call.1} parent=1 // pred_fallthru
      _
    // While loop
    $region22: #{tpu_custom_call.1} parent=1 // loop_pre_header
      _
    $region23: #{tpu_custom_call.1} parent=1 // loop_header
      %s66 = sphi 0, %s68
      %p67 = scmp.ge.s32.totalorder %s66, %s44
      %v71 = vphi 0.0, %v110
    $region24: #{tpu_custom_call.1} parent=1 // loop_header_branch
      %70 = sbr.rel (%p67) target = $region28
    $region25: #{tpu_custom_call.1} parent=1 // loop_body
      %p72 = scmp.lt.s32.totalorder %s66, 0
      %s73 = ssub.s32 0, %s66
      %s74 = scalar_select %p72, %s73, %s66
      %s75 = sand.u32 %s74, 1
      %s76 = ssub.s32 0, %s75
      %s77 = scalar_select %p72, %s76, %s75
      %s78 = scalar_lea.vmem [#allocation2], %s77
      %s79 = scalar_lea.sflag [#allocation3], %s77
      %s80 = smul.u32 1, 1
      %s81 = sshll.u32 %s80, 4
      %82 = dma.done %s79, %s81
      %s83 = sadd.s32 %s66, 1
      %p84 = scmp.lt.s32.totalorder %s83, %s44
      // Predicated region
      $region29: #{tpu_custom_call.1} parent=25 // pred_check
        %p85 = pneg %p84
      $region30: #{tpu_custom_call.1} parent=25 // pred_check_branch
        %87 = sbr.rel (%p85) target = $region32
      $region31: #{tpu_custom_call.1} parent=25 // pred_region
        %s88 = sadd.s32 %s43, %s66
        %s89 = sadd.s32 %s88, 1
        %p90 = scmp.lt.s32.totalorder %s89, 23
        %s91 = scalar_select %p90, %s89, 23
        %s92 = ssub.s32 1, %s77
        %s93 = sld [smem:[#allocation6 + %s91]]
        %s94 = smul.addr %s93, 16
        %s95 = scalar_lea.hbm %s3, %s94
        %s96 = scalar_lea.vmem [#allocation2], %s92
        %s97 = scalar_lea.sflag [#allocation3], %s92
        // Predicated region
        $region33: #{tpu_custom_call.1} parent=31 // pred_check
          _
        $region34: #{tpu_custom_call.1} parent=31 // pred_check_branch
          %99 = sbr.rel target = $region36
        $region35: #{tpu_custom_call.1} parent=31 // pred_region
          %100 = sst [smem:[#allocation15]] [#allocation18]
          %101 = sst [smem:[#allocation16]] [#allocation17]
        $region36: #{tpu_custom_call.1} parent=31 // pred_fallthru
          _
        %103 = shalt.err (0)
        %s105 = sshll.u32 %s96, 4
        %s106 = int_to_ptr.vmem [resolvable:$true] %s105
        %108 = dma.hbm_to_vmem [thread:$0]  %s95, 16, %s106, %s97
      $region32: #{tpu_custom_call.1} parent=25 // pred_fallthru
        _
      %v109 = vld [vmem:[%s78] sm:$0x1]
      %v110 = vadd.f32 %v71, %v109
    $region26: #{tpu_custom_call.1} parent=1 // loop_footer
      %s68 = sadd.s32 %s66, 1
    $region27: #{tpu_custom_call.1} parent=1 // loop_footer_branch
      %65 = sbr.rel target = $region23
    $region28: #{tpu_custom_call.1} parent=1 // loop_exit
      _
    %p111 = scmp.gt.s32.totalorder %s44, 1
    %s112 = scalar_select %p111, %s44, 1
    %s113 = scvt.s32.f32 %s112
    %v114 = vstv %s113
    %v115 = vrcp.pop %v114
    %v116 = vmul.f32 %v71, %v115
    %117 = vst [vmem:[#allocation4] sm:$0x1] %v116
    %s118 = sadd.s32 %s42, 1
    %s119 = sld [smem:[#allocation7 + %s118]]
    %s120 = sld [smem:[#allocation8 + %s118]]
    %p121 = scmp.gt.s32.totalorder %s120, 0
    // Predicated region
    $region37: #{tpu_custom_call.1} parent=1 // pred_check
      %p122 = pneg %p121
    $region38: #{tpu_custom_call.1} parent=1 // pred_check_branch
      %124 = sbr.rel (%p122) target = $region40
    $region39: #{tpu_custom_call.1} parent=1 // pred_region
      %p125 = scmp.lt.s32.totalorder %s119, 23
      %s126 = scalar_select %p125, %s119, 23
      %s127 = sld [smem:[#allocation6 + %s126]]
      %s128 = smul.addr %s127, 16
      %s129 = scalar_lea.hbm %s3, %s128
      // Predicated region
      $region41: #{tpu_custom_call.1} parent=39 // pred_check
        _
      $region42: #{tpu_custom_call.1} parent=39 // pred_check_branch
        %131 = sbr.rel target = $region44
      $region43: #{tpu_custom_call.1} parent=39 // pred_region
        %132 = sst [smem:[#allocation15]] [#allocation20]
        %133 = sst [smem:[#allocation16]] [#allocation19]
      $region44: #{tpu_custom_call.1} parent=39 // pred_fallthru
        _
      %135 = shalt.err (0)
      %s137 = sshll.u32 [#allocation2], 4
      %s138 = int_to_ptr.vmem [resolvable:$true] %s137
      %140 = dma.hbm_to_vmem [thread:$0]  %s129, 16, %s138, [#allocation3]
    $region40: #{tpu_custom_call.1} parent=1 // pred_fallthru
      _
    // While loop
    $region45: #{tpu_custom_call.1} parent=1 // loop_pre_header
      _
    $region46: #{tpu_custom_call.1} parent=1 // loop_header
      %s142 = sphi 0, %s144
      %p143 = scmp.ge.s32.totalorder %s142, %s120
      %v147 = vphi 0.0, %v186
    $region47: #{tpu_custom_call.1} parent=1 // loop_header_branch
      %146 = sbr.rel (%p143) target = $region51
    $region48: #{tpu_custom_call.1} parent=1 // loop_body
      %p148 = scmp.lt.s32.totalorder %s142, 0
      %s149 = ssub.s32 0, %s142
      %s150 = scalar_select %p148, %s149, %s142
      %s151 = sand.u32 %s150, 1
      %s152 = ssub.s32 0, %s151
      %s153 = scalar_select %p148, %s152, %s151
      %s154 = scalar_lea.vmem [#allocation2], %s153
      %s155 = scalar_lea.sflag [#allocation3], %s153
      %s156 = smul.u32 1, 1
      %s157 = sshll.u32 %s156, 4
      %158 = dma.done %s155, %s157
      %s159 = sadd.s32 %s142, 1
      %p160 = scmp.lt.s32.totalorder %s159, %s120
      // Predicated region
      $region52: #{tpu_custom_call.1} parent=48 // pred_check
        %p161 = pneg %p160
      $region53: #{tpu_custom_call.1} parent=48 // pred_check_branch
        %163 = sbr.rel (%p161) target = $region55
      $region54: #{tpu_custom_call.1} parent=48 // pred_region
        %s164 = sadd.s32 %s119, %s142
        %s165 = sadd.s32 %s164, 1
        %p166 = scmp.lt.s32.totalorder %s165, 23
        %s167 = scalar_select %p166, %s165, 23
        %s168 = ssub.s32 1, %s153
        %s169 = sld [smem:[#allocation6 + %s167]]
        %s170 = smul.addr %s169, 16
        %s171 = scalar_lea.hbm %s3, %s170
        %s172 = scalar_lea.vmem [#allocation2], %s168
        %s173 = scalar_lea.sflag [#allocation3], %s168
        // Predicated region
        $region56: #{tpu_custom_call.1} parent=54 // pred_check
          _
        $region57: #{tpu_custom_call.1} parent=54 // pred_check_branch
          %175 = sbr.rel target = $region59
        $region58: #{tpu_custom_call.1} parent=54 // pred_region
          %176 = sst [smem:[#allocation15]] [#allocation22]
          %177 = sst [smem:[#allocation16]] [#allocation21]
        $region59: #{tpu_custom_call.1} parent=54 // pred_fallthru
          _
        %179 = shalt.err (0)
        %s181 = sshll.u32 %s172, 4
        %s182 = int_to_ptr.vmem [resolvable:$true] %s181
        %184 = dma.hbm_to_vmem [thread:$0]  %s171, 16, %s182, %s173
      $region55: #{tpu_custom_call.1} parent=48 // pred_fallthru
        _
      %v185 = vld [vmem:[%s154] sm:$0x1]
      %v186 = vadd.f32 %v147, %v185
    $region49: #{tpu_custom_call.1} parent=1 // loop_footer
      %s144 = sadd.s32 %s142, 1
    $region50: #{tpu_custom_call.1} parent=1 // loop_footer_branch
      %141 = sbr.rel target = $region46
    $region51: #{tpu_custom_call.1} parent=1 // loop_exit
      _
    %p187 = scmp.gt.s32.totalorder %s120, 1
    %s188 = scalar_select %p187, %s120, 1
    %s189 = scvt.s32.f32 %s188
    %v190 = vstv %s189
    %v191 = vrcp.pop %v190
    %v192 = vmul.f32 %v147, %v191
    %193 = vst [vmem:[#allocation4 + $0x1] sm:$0x1] %v192
    %s194 = sadd.s32 %s42, 2
    %s195 = sld [smem:[#allocation7 + %s194]]
    %s196 = sld [smem:[#allocation8 + %s194]]
    %p197 = scmp.gt.s32.totalorder %s196, 0
    // Predicated region
    $region60: #{tpu_custom_call.1} parent=1 // pred_check
      %p198 = pneg %p197
    $region61: #{tpu_custom_call.1} parent=1 // pred_check_branch
      %200 = sbr.rel (%p198) target = $region63
    $region62: #{tpu_custom_call.1} parent=1 // pred_region
      %p201 = scmp.lt.s32.totalorder %s195, 23
      %s202 = scalar_select %p201, %s195, 23
      %s203 = sld [smem:[#allocation6 + %s202]]
      %s204 = smul.addr %s203, 16
      %s205 = scalar_lea.hbm %s3, %s204
      // Predicated region
      $region64: #{tpu_custom_call.1} parent=62 // pred_check
        _
      $region65: #{tpu_custom_call.1} parent=62 // pred_check_branch
        %207 = sbr.rel target = $region67
      $region66: #{tpu_custom_call.1} parent=62 // pred_region
        %208 = sst [smem:[#allocation15]] [#allocation24]
        %209 = sst [smem:[#allocation16]] [#allocation23]
      $region67: #{tpu_custom_call.1} parent=62 // pred_fallthru
        _
      %211 = shalt.err (0)
      %s213 = sshll.u32 [#allocation2], 4
      %s214 = int_to_ptr.vmem [resolvable:$true] %s213
      %216 = dma.hbm_to_vmem [thread:$0]  %s205, 16, %s214, [#allocation3]
    $region63: #{tpu_custom_call.1} parent=1 // pred_fallthru
      _
    // While loop
    $region68: #{tpu_custom_call.1} parent=1 // loop_pre_header
      _
    $region69: #{tpu_custom_call.1} parent=1 // loop_header
      %s218 = sphi 0, %s220
      %p219 = scmp.ge.s32.totalorder %s218, %s196
      %v223 = vphi 0.0, %v262
    $region70: #{tpu_custom_call.1} parent=1 // loop_header_branch
      %222 = sbr.rel (%p219) target = $region74
    $region71: #{tpu_custom_call.1} parent=1 // loop_body
      %p224 = scmp.lt.s32.totalorder %s218, 0
      %s225 = ssub.s32 0, %s218
      %s226 = scalar_select %p224, %s225, %s218
      %s227 = sand.u32 %s226, 1
      %s228 = ssub.s32 0, %s227
      %s229 = scalar_select %p224, %s228, %s227
      %s230 = scalar_lea.vmem [#allocation2], %s229
      %s231 = scalar_lea.sflag [#allocation3], %s229
      %s232 = smul.u32 1, 1
      %s233 = sshll.u32 %s232, 4
      %234 = dma.done %s231, %s233
      %s235 = sadd.s32 %s218, 1
      %p236 = scmp.lt.s32.totalorder %s235, %s196
      // Predicated region
      $region75: #{tpu_custom_call.1} parent=71 // pred_check
        %p237 = pneg %p236
      $region76: #{tpu_custom_call.1} parent=71 // pred_check_branch
        %239 = sbr.rel (%p237) target = $region78
      $region77: #{tpu_custom_call.1} parent=71 // pred_region
        %s240 = sadd.s32 %s195, %s218
        %s241 = sadd.s32 %s240, 1
        %p242 = scmp.lt.s32.totalorder %s241, 23
        %s243 = scalar_select %p242, %s241, 23
        %s244 = ssub.s32 1, %s229
        %s245 = sld [smem:[#allocation6 + %s243]]
        %s246 = smul.addr %s245, 16
        %s247 = scalar_lea.hbm %s3, %s246
        %s248 = scalar_lea.vmem [#allocation2], %s244
        %s249 = scalar_lea.sflag [#allocation3], %s244
        // Predicated region
        $region79: #{tpu_custom_call.1} parent=77 // pred_check
          _
        $region80: #{tpu_custom_call.1} parent=77 // pred_check_branch
          %251 = sbr.rel target = $region82
        $region81: #{tpu_custom_call.1} parent=77 // pred_region
          %252 = sst [smem:[#allocation15]] [#allocation26]
          %253 = sst [smem:[#allocation16]] [#allocation25]
        $region82: #{tpu_custom_call.1} parent=77 // pred_fallthru
          _
        %255 = shalt.err (0)
        %s257 = sshll.u32 %s248, 4
        %s258 = int_to_ptr.vmem [resolvable:$true] %s257
        %260 = dma.hbm_to_vmem [thread:$0]  %s247, 16, %s258, %s249
      $region78: #{tpu_custom_call.1} parent=71 // pred_fallthru
        _
      %v261 = vld [vmem:[%s230] sm:$0x1]
      %v262 = vadd.f32 %v223, %v261
    $region72: #{tpu_custom_call.1} parent=1 // loop_footer
      %s220 = sadd.s32 %s218, 1
    $region73: #{tpu_custom_call.1} parent=1 // loop_footer_branch
      %217 = sbr.rel target = $region69
    $region74: #{tpu_custom_call.1} parent=1 // loop_exit
      _
    %p263 = scmp.gt.s32.totalorder %s196, 1
    %s264 = scalar_select %p263, %s196, 1
    %s265 = scvt.s32.f32 %s264
    %v266 = vstv %s265
    %v267 = vrcp.pop %v266
    %v268 = vmul.f32 %v223, %v267
    %269 = vst [vmem:[#allocation4 + $0x2] sm:$0x1] %v268
    %s270 = sadd.s32 %s42, 3
    %s271 = sld [smem:[#allocation7 + %s270]]
    %s272 = sld [smem:[#allocation8 + %s270]]
    %p273 = scmp.gt.s32.totalorder %s272, 0
    // Predicated region
    $region83: #{tpu_custom_call.1} parent=1 // pred_check
      %p274 = pneg %p273
    $region84: #{tpu_custom_call.1} parent=1 // pred_check_branch
      %276 = sbr.rel (%p274) target = $region86
    $region85: #{tpu_custom_call.1} parent=1 // pred_region
      %p277 = scmp.lt.s32.totalorder %s271, 23
      %s278 = scalar_select %p277, %s271, 23
      %s279 = sld [smem:[#allocation6 + %s278]]
      %s280 = smul.addr %s279, 16
      %s281 = scalar_lea.hbm %s3, %s280
      // Predicated region
      $region87: #{tpu_custom_call.1} parent=85 // pred_check
        _
      $region88: #{tpu_custom_call.1} parent=85 // pred_check_branch
        %283 = sbr.rel target = $region90
      $region89: #{tpu_custom_call.1} parent=85 // pred_region
        %284 = sst [smem:[#allocation15]] [#allocation28]
        %285 = sst [smem:[#allocation16]] [#allocation27]
      $region90: #{tpu_custom_call.1} parent=85 // pred_fallthru
        _
      %287 = shalt.err (0)
      %s289 = sshll.u32 [#allocation2], 4
      %s290 = int_to_ptr.vmem [resolvable:$true] %s289
      %292 = dma.hbm_to_vmem [thread:$0]  %s281, 16, %s290, [#allocation3]
    $region86: #{tpu_custom_call.1} parent=1 // pred_fallthru
      _
    // While loop
    $region91: #{tpu_custom_call.1} parent=1 // loop_pre_header
      _
    $region92: #{tpu_custom_call.1} parent=1 // loop_header
      %s294 = sphi 0, %s296
      %p295 = scmp.ge.s32.totalorder %s294, %s272
      %v299 = vphi 0.0, %v338
    $region93: #{tpu_custom_call.1} parent=1 // loop_header_branch
      %298 = sbr.rel (%p295) target = $region97
    $region94: #{tpu_custom_call.1} parent=1 // loop_body
      %p300 = scmp.lt.s32.totalorder %s294, 0
      %s301 = ssub.s32 0, %s294
      %s302 = scalar_select %p300, %s301, %s294
      %s303 = sand.u32 %s302, 1
      %s304 = ssub.s32 0, %s303
      %s305 = scalar_select %p300, %s304, %s303
      %s306 = scalar_lea.vmem [#allocation2], %s305
      %s307 = scalar_lea.sflag [#allocation3], %s305
      %s308 = smul.u32 1, 1
      %s309 = sshll.u32 %s308, 4
      %310 = dma.done %s307, %s309
      %s311 = sadd.s32 %s294, 1
      %p312 = scmp.lt.s32.totalorder %s311, %s272
      // Predicated region
      $region98: #{tpu_custom_call.1} parent=94 // pred_check
        %p313 = pneg %p312
      $region99: #{tpu_custom_call.1} parent=94 // pred_check_branch
        %315 = sbr.rel (%p313) target = $region101
      $region100: #{tpu_custom_call.1} parent=94 // pred_region
        %s316 = sadd.s32 %s271, %s294
        %s317 = sadd.s32 %s316, 1
        %p318 = scmp.lt.s32.totalorder %s317, 23
        %s319 = scalar_select %p318, %s317, 23
        %s320 = ssub.s32 1, %s305
        %s321 = sld [smem:[#allocation6 + %s319]]
        %s322 = smul.addr %s321, 16
        %s323 = scalar_lea.hbm %s3, %s322
        %s324 = scalar_lea.vmem [#allocation2], %s320
        %s325 = scalar_lea.sflag [#allocation3], %s320
        // Predicated region
        $region102: #{tpu_custom_call.1} parent=100 // pred_check
          _
        $region103: #{tpu_custom_call.1} parent=100 // pred_check_branch
          %327 = sbr.rel target = $region105
        $region104: #{tpu_custom_call.1} parent=100 // pred_region
          %328 = sst [smem:[#allocation15]] [#allocation30]
          %329 = sst [smem:[#allocation16]] [#allocation29]
        $region105: #{tpu_custom_call.1} parent=100 // pred_fallthru
          _
        %331 = shalt.err (0)
        %s333 = sshll.u32 %s324, 4
        %s334 = int_to_ptr.vmem [resolvable:$true] %s333
        %336 = dma.hbm_to_vmem [thread:$0]  %s323, 16, %s334, %s325
      $region101: #{tpu_custom_call.1} parent=94 // pred_fallthru
        _
      %v337 = vld [vmem:[%s306] sm:$0x1]
      %v338 = vadd.f32 %v299, %v337
    $region95: #{tpu_custom_call.1} parent=1 // loop_footer
      %s296 = sadd.s32 %s294, 1
    $region96: #{tpu_custom_call.1} parent=1 // loop_footer_branch
      %293 = sbr.rel target = $region92
    $region97: #{tpu_custom_call.1} parent=1 // loop_exit
      _
    %p339 = scmp.gt.s32.totalorder %s272, 1
    %s340 = scalar_select %p339, %s272, 1
    %s341 = scvt.s32.f32 %s340
    %v342 = vstv %s341
    %v343 = vrcp.pop %v342
    %v344 = vmul.f32 %v299, %v343
    %345 = vst [vmem:[#allocation4 + $0x3] sm:$0x1] %v344
    %s346 = sadd.s32 %s42, 4
    %s347 = sld [smem:[#allocation7 + %s346]]
    %s348 = sld [smem:[#allocation8 + %s346]]
    %p349 = scmp.gt.s32.totalorder %s348, 0
    // Predicated region
    $region106: #{tpu_custom_call.1} parent=1 // pred_check
      %p350 = pneg %p349
    $region107: #{tpu_custom_call.1} parent=1 // pred_check_branch
      %352 = sbr.rel (%p350) target = $region109
    $region108: #{tpu_custom_call.1} parent=1 // pred_region
      %p353 = scmp.lt.s32.totalorder %s347, 23
      %s354 = scalar_select %p353, %s347, 23
      %s355 = sld [smem:[#allocation6 + %s354]]
      %s356 = smul.addr %s355, 16
      %s357 = scalar_lea.hbm %s3, %s356
      // Predicated region
      $region110: #{tpu_custom_call.1} parent=108 // pred_check
        _
      $region111: #{tpu_custom_call.1} parent=108 // pred_check_branch
        %359 = sbr.rel target = $region113
      $region112: #{tpu_custom_call.1} parent=108 // pred_region
        %360 = sst [smem:[#allocation15]] [#allocation32]
        %361 = sst [smem:[#allocation16]] [#allocation31]
      $region113: #{tpu_custom_call.1} parent=108 // pred_fallthru
        _
      %363 = shalt.err (0)
      %s365 = sshll.u32 [#allocation2], 4
      %s366 = int_to_ptr.vmem [resolvable:$true] %s365
      %368 = dma.hbm_to_vmem [thread:$0]  %s357, 16, %s366, [#allocation3]
    $region109: #{tpu_custom_call.1} parent=1 // pred_fallthru
      _
    // While loop
    $region114: #{tpu_custom_call.1} parent=1 // loop_pre_header
      _
    $region115: #{tpu_custom_call.1} parent=1 // loop_header
      %s370 = sphi 0, %s372
      %p371 = scmp.ge.s32.totalorder %s370, %s348
      %v375 = vphi 0.0, %v414
    $region116: #{tpu_custom_call.1} parent=1 // loop_header_branch
      %374 = sbr.rel (%p371) target = $region120
    $region117: #{tpu_custom_call.1} parent=1 // loop_body
      %p376 = scmp.lt.s32.totalorder %s370, 0
      %s377 = ssub.s32 0, %s370
      %s378 = scalar_select %p376, %s377, %s370
      %s379 = sand.u32 %s378, 1
      %s380 = ssub.s32 0, %s379
      %s381 = scalar_select %p376, %s380, %s379
      %s382 = scalar_lea.vmem [#allocation2], %s381
      %s383 = scalar_lea.sflag [#allocation3], %s381
      %s384 = smul.u32 1, 1
      %s385 = sshll.u32 %s384, 4
      %386 = dma.done %s383, %s385
      %s387 = sadd.s32 %s370, 1
      %p388 = scmp.lt.s32.totalorder %s387, %s348
      // Predicated region
      $region121: #{tpu_custom_call.1} parent=117 // pred_check
        %p389 = pneg %p388
      $region122: #{tpu_custom_call.1} parent=117 // pred_check_branch
        %391 = sbr.rel (%p389) target = $region124
      $region123: #{tpu_custom_call.1} parent=117 // pred_region
        %s392 = sadd.s32 %s347, %s370
        %s393 = sadd.s32 %s392, 1
        %p394 = scmp.lt.s32.totalorder %s393, 23
        %s395 = scalar_select %p394, %s393, 23
        %s396 = ssub.s32 1, %s381
        %s397 = sld [smem:[#allocation6 + %s395]]
        %s398 = smul.addr %s397, 16
        %s399 = scalar_lea.hbm %s3, %s398
        %s400 = scalar_lea.vmem [#allocation2], %s396
        %s401 = scalar_lea.sflag [#allocation3], %s396
        // Predicated region
        $region125: #{tpu_custom_call.1} parent=123 // pred_check
          _
        $region126: #{tpu_custom_call.1} parent=123 // pred_check_branch
          %403 = sbr.rel target = $region128
        $region127: #{tpu_custom_call.1} parent=123 // pred_region
          %404 = sst [smem:[#allocation15]] [#allocation34]
          %405 = sst [smem:[#allocation16]] [#allocation33]
        $region128: #{tpu_custom_call.1} parent=123 // pred_fallthru
          _
        %407 = shalt.err (0)
        %s409 = sshll.u32 %s400, 4
        %s410 = int_to_ptr.vmem [resolvable:$true] %s409
        %412 = dma.hbm_to_vmem [thread:$0]  %s399, 16, %s410, %s401
      $region124: #{tpu_custom_call.1} parent=117 // pred_fallthru
        _
      %v413 = vld [vmem:[%s382] sm:$0x1]
      %v414 = vadd.f32 %v375, %v413
    $region118: #{tpu_custom_call.1} parent=1 // loop_footer
      %s372 = sadd.s32 %s370, 1
    $region119: #{tpu_custom_call.1} parent=1 // loop_footer_branch
      %369 = sbr.rel target = $region115
    $region120: #{tpu_custom_call.1} parent=1 // loop_exit
      _
    %p415 = scmp.gt.s32.totalorder %s348, 1
    %s416 = scalar_select %p415, %s348, 1
    %s417 = scvt.s32.f32 %s416
    %v418 = vstv %s417
    %v419 = vrcp.pop %v418
    %v420 = vmul.f32 %v375, %v419
    %421 = vst [vmem:[#allocation4 + $0x4] sm:$0x1] %v420
    %s422 = sadd.s32 %s42, 5
    %s423 = sld [smem:[#allocation7 + %s422]]
    %s424 = sld [smem:[#allocation8 + %s422]]
    %p425 = scmp.gt.s32.totalorder %s424, 0
    // Predicated region
    $region129: #{tpu_custom_call.1} parent=1 // pred_check
      %p426 = pneg %p425
    $region130: #{tpu_custom_call.1} parent=1 // pred_check_branch
      %428 = sbr.rel (%p426) target = $region132
    $region131: #{tpu_custom_call.1} parent=1 // pred_region
      %p429 = scmp.lt.s32.totalorder %s423, 23
      %s430 = scalar_select %p429, %s423, 23
      %s431 = sld [smem:[#allocation6 + %s430]]
      %s432 = smul.addr %s431, 16
      %s433 = scalar_lea.hbm %s3, %s432
      // Predicated region
      $region133: #{tpu_custom_call.1} parent=131 // pred_check
        _
      $region134: #{tpu_custom_call.1} parent=131 // pred_check_branch
        %435 = sbr.rel target = $region136
      $region135: #{tpu_custom_call.1} parent=131 // pred_region
        %436 = sst [smem:[#allocation15]] [#allocation36]
        %437 = sst [smem:[#allocation16]] [#allocation35]
      $region136: #{tpu_custom_call.1} parent=131 // pred_fallthru
        _
      %439 = shalt.err (0)
      %s441 = sshll.u32 [#allocation2], 4
      %s442 = int_to_ptr.vmem [resolvable:$true] %s441
      %444 = dma.hbm_to_vmem [thread:$0]  %s433, 16, %s442, [#allocation3]
    $region132: #{tpu_custom_call.1} parent=1 // pred_fallthru
      _
    // While loop
    $region137: #{tpu_custom_call.1} parent=1 // loop_pre_header
      _
    $region138: #{tpu_custom_call.1} parent=1 // loop_header
      %s446 = sphi 0, %s448
      %p447 = scmp.ge.s32.totalorder %s446, %s424
      %v451 = vphi 0.0, %v490
    $region139: #{tpu_custom_call.1} parent=1 // loop_header_branch
      %450 = sbr.rel (%p447) target = $region143
    $region140: #{tpu_custom_call.1} parent=1 // loop_body
      %p452 = scmp.lt.s32.totalorder %s446, 0
      %s453 = ssub.s32 0, %s446
      %s454 = scalar_select %p452, %s453, %s446
      %s455 = sand.u32 %s454, 1
      %s456 = ssub.s32 0, %s455
      %s457 = scalar_select %p452, %s456, %s455
      %s458 = scalar_lea.vmem [#allocation2], %s457
      %s459 = scalar_lea.sflag [#allocation3], %s457
      %s460 = smul.u32 1, 1
      %s461 = sshll.u32 %s460, 4
      %462 = dma.done %s459, %s461
      %s463 = sadd.s32 %s446, 1
      %p464 = scmp.lt.s32.totalorder %s463, %s424
      // Predicated region
      $region144: #{tpu_custom_call.1} parent=140 // pred_check
        %p465 = pneg %p464
      $region145: #{tpu_custom_call.1} parent=140 // pred_check_branch
        %467 = sbr.rel (%p465) target = $region147
      $region146: #{tpu_custom_call.1} parent=140 // pred_region
        %s468 = sadd.s32 %s423, %s446
        %s469 = sadd.s32 %s468, 1
        %p470 = scmp.lt.s32.totalorder %s469, 23
        %s471 = scalar_select %p470, %s469, 23
        %s472 = ssub.s32 1, %s457
        %s473 = sld [smem:[#allocation6 + %s471]]
        %s474 = smul.addr %s473, 16
        %s475 = scalar_lea.hbm %s3, %s474
        %s476 = scalar_lea.vmem [#allocation2], %s472
        %s477 = scalar_lea.sflag [#allocation3], %s472
        // Predicated region
        $region148: #{tpu_custom_call.1} parent=146 // pred_check
          _
        $region149: #{tpu_custom_call.1} parent=146 // pred_check_branch
          %479 = sbr.rel target = $region151
        $region150: #{tpu_custom_call.1} parent=146 // pred_region
          %480 = sst [smem:[#allocation15]] [#allocation38]
          %481 = sst [smem:[#allocation16]] [#allocation37]
        $region151: #{tpu_custom_call.1} parent=146 // pred_fallthru
          _
        %483 = shalt.err (0)
        %s485 = sshll.u32 %s476, 4
        %s486 = int_to_ptr.vmem [resolvable:$true] %s485
        %488 = dma.hbm_to_vmem [thread:$0]  %s475, 16, %s486, %s477
      $region147: #{tpu_custom_call.1} parent=140 // pred_fallthru
        _
      %v489 = vld [vmem:[%s458] sm:$0x1]
      %v490 = vadd.f32 %v451, %v489
    $region141: #{tpu_custom_call.1} parent=1 // loop_footer
      %s448 = sadd.s32 %s446, 1
    $region142: #{tpu_custom_call.1} parent=1 // loop_footer_branch
      %445 = sbr.rel target = $region138
    $region143: #{tpu_custom_call.1} parent=1 // loop_exit
      _
    %p491 = scmp.gt.s32.totalorder %s424, 1
    %s492 = scalar_select %p491, %s424, 1
    %s493 = scvt.s32.f32 %s492
    %v494 = vstv %s493
    %v495 = vrcp.pop %v494
    %v496 = vmul.f32 %v451, %v495
    %497 = vst [vmem:[#allocation4 + $0x5] sm:$0x1] %v496
    %s498 = sadd.s32 %s42, 6
    %s499 = sld [smem:[#allocation7 + %s498]]
    %s500 = sld [smem:[#allocation8 + %s498]]
    %p501 = scmp.gt.s32.totalorder %s500, 0
    // Predicated region
    $region152: #{tpu_custom_call.1} parent=1 // pred_check
      %p502 = pneg %p501
    $region153: #{tpu_custom_call.1} parent=1 // pred_check_branch
      %504 = sbr.rel (%p502) target = $region155
    $region154: #{tpu_custom_call.1} parent=1 // pred_region
      %p505 = scmp.lt.s32.totalorder %s499, 23
      %s506 = scalar_select %p505, %s499, 23
      %s507 = sld [smem:[#allocation6 + %s506]]
      %s508 = smul.addr %s507, 16
      %s509 = scalar_lea.hbm %s3, %s508
      // Predicated region
      $region156: #{tpu_custom_call.1} parent=154 // pred_check
        _
      $region157: #{tpu_custom_call.1} parent=154 // pred_check_branch
        %511 = sbr.rel target = $region159
      $region158: #{tpu_custom_call.1} parent=154 // pred_region
        %512 = sst [smem:[#allocation15]] [#allocation40]
        %513 = sst [smem:[#allocation16]] [#allocation39]
      $region159: #{tpu_custom_call.1} parent=154 // pred_fallthru
        _
      %515 = shalt.err (0)
      %s517 = sshll.u32 [#allocation2], 4
      %s518 = int_to_ptr.vmem [resolvable:$true] %s517
      %520 = dma.hbm_to_vmem [thread:$0]  %s509, 16, %s518, [#allocation3]
    $region155: #{tpu_custom_call.1} parent=1 // pred_fallthru
      _
    // While loop
    $region160: #{tpu_custom_call.1} parent=1 // loop_pre_header
      _
    $region161: #{tpu_custom_call.1} parent=1 // loop_header
      %s522 = sphi 0, %s524
      %p523 = scmp.ge.s32.totalorder %s522, %s500
      %v527 = vphi 0.0, %v566
    $region162: #{tpu_custom_call.1} parent=1 // loop_header_branch
      %526 = sbr.rel (%p523) target = $region166
    $region163: #{tpu_custom_call.1} parent=1 // loop_body
      %p528 = scmp.lt.s32.totalorder %s522, 0
      %s529 = ssub.s32 0, %s522
      %s530 = scalar_select %p528, %s529, %s522
      %s531 = sand.u32 %s530, 1
      %s532 = ssub.s32 0, %s531
      %s533 = scalar_select %p528, %s532, %s531
      %s534 = scalar_lea.vmem [#allocation2], %s533
      %s535 = scalar_lea.sflag [#allocation3], %s533
      %s536 = smul.u32 1, 1
      %s537 = sshll.u32 %s536, 4
      %538 = dma.done %s535, %s537
      %s539 = sadd.s32 %s522, 1
      %p540 = scmp.lt.s32.totalorder %s539, %s500
      // Predicated region
      $region167: #{tpu_custom_call.1} parent=163 // pred_check
        %p541 = pneg %p540
      $region168: #{tpu_custom_call.1} parent=163 // pred_check_branch
        %543 = sbr.rel (%p541) target = $region170
      $region169: #{tpu_custom_call.1} parent=163 // pred_region
        %s544 = sadd.s32 %s499, %s522
        %s545 = sadd.s32 %s544, 1
        %p546 = scmp.lt.s32.totalorder %s545, 23
        %s547 = scalar_select %p546, %s545, 23
        %s548 = ssub.s32 1, %s533
        %s549 = sld [smem:[#allocation6 + %s547]]
        %s550 = smul.addr %s549, 16
        %s551 = scalar_lea.hbm %s3, %s550
        %s552 = scalar_lea.vmem [#allocation2], %s548
        %s553 = scalar_lea.sflag [#allocation3], %s548
        // Predicated region
        $region171: #{tpu_custom_call.1} parent=169 // pred_check
          _
        $region172: #{tpu_custom_call.1} parent=169 // pred_check_branch
          %555 = sbr.rel target = $region174
        $region173: #{tpu_custom_call.1} parent=169 // pred_region
          %556 = sst [smem:[#allocation15]] [#allocation42]
          %557 = sst [smem:[#allocation16]] [#allocation41]
        $region174: #{tpu_custom_call.1} parent=169 // pred_fallthru
          _
        %559 = shalt.err (0)
        %s561 = sshll.u32 %s552, 4
        %s562 = int_to_ptr.vmem [resolvable:$true] %s561
        %564 = dma.hbm_to_vmem [thread:$0]  %s551, 16, %s562, %s553
      $region170: #{tpu_custom_call.1} parent=163 // pred_fallthru
        _
      %v565 = vld [vmem:[%s534] sm:$0x1]
      %v566 = vadd.f32 %v527, %v565
    $region164: #{tpu_custom_call.1} parent=1 // loop_footer
      %s524 = sadd.s32 %s522, 1
    $region165: #{tpu_custom_call.1} parent=1 // loop_footer_branch
      %521 = sbr.rel target = $region161
    $region166: #{tpu_custom_call.1} parent=1 // loop_exit
      _
    %p567 = scmp.gt.s32.totalorder %s500, 1
    %s568 = scalar_select %p567, %s500, 1
    %s569 = scvt.s32.f32 %s568
    %v570 = vstv %s569
    %v571 = vrcp.pop %v570
    %v572 = vmul.f32 %v527, %v571
    %573 = vst [vmem:[#allocation4 + $0x6] sm:$0x1] %v572
    %s574 = sadd.s32 %s42, 7
    %s575 = sld [smem:[#allocation7 + %s574]]
    %s576 = sld [smem:[#allocation8 + %s574]]
    %p577 = scmp.gt.s32.totalorder %s576, 0
    // Predicated region
    $region175: #{tpu_custom_call.1} parent=1 // pred_check
      %p578 = pneg %p577
    $region176: #{tpu_custom_call.1} parent=1 // pred_check_branch
      %580 = sbr.rel (%p578) target = $region178
    $region177: #{tpu_custom_call.1} parent=1 // pred_region
      %p581 = scmp.lt.s32.totalorder %s575, 23
      %s582 = scalar_select %p581, %s575, 23
      %s583 = sld [smem:[#allocation6 + %s582]]
      %s584 = smul.addr %s583, 16
      %s585 = scalar_lea.hbm %s3, %s584
      // Predicated region
      $region179: #{tpu_custom_call.1} parent=177 // pred_check
        _
      $region180: #{tpu_custom_call.1} parent=177 // pred_check_branch
        %587 = sbr.rel target = $region182
      $region181: #{tpu_custom_call.1} parent=177 // pred_region
        %588 = sst [smem:[#allocation15]] [#allocation44]
        %589 = sst [smem:[#allocation16]] [#allocation43]
      $region182: #{tpu_custom_call.1} parent=177 // pred_fallthru
        _
      %591 = shalt.err (0)
      %s593 = sshll.u32 [#allocation2], 4
      %s594 = int_to_ptr.vmem [resolvable:$true] %s593
      %596 = dma.hbm_to_vmem [thread:$0]  %s585, 16, %s594, [#allocation3]
    $region178: #{tpu_custom_call.1} parent=1 // pred_fallthru
      _
    // While loop
    $region183: #{tpu_custom_call.1} parent=1 // loop_pre_header
      _
    $region184: #{tpu_custom_call.1} parent=1 // loop_header
      %s598 = sphi 0, %s600
      %p599 = scmp.ge.s32.totalorder %s598, %s576
      %v603 = vphi 0.0, %v642
    $region185: #{tpu_custom_call.1} parent=1 // loop_header_branch
      %602 = sbr.rel (%p599) target = $region189
    $region186: #{tpu_custom_call.1} parent=1 // loop_body
      %p604 = scmp.lt.s32.totalorder %s598, 0
      %s605 = ssub.s32 0, %s598
      %s606 = scalar_select %p604, %s605, %s598
      %s607 = sand.u32 %s606, 1
      %s608 = ssub.s32 0, %s607
      %s609 = scalar_select %p604, %s608, %s607
      %s610 = scalar_lea.vmem [#allocation2], %s609
      %s611 = scalar_lea.sflag [#allocation3], %s609
      %s612 = smul.u32 1, 1
      %s613 = sshll.u32 %s612, 4
      %614 = dma.done %s611, %s613
      %s615 = sadd.s32 %s598, 1
      %p616 = scmp.lt.s32.totalorder %s615, %s576
      // Predicated region
      $region190: #{tpu_custom_call.1} parent=186 // pred_check
        %p617 = pneg %p616
      $region191: #{tpu_custom_call.1} parent=186 // pred_check_branch
        %619 = sbr.rel (%p617) target = $region193
      $region192: #{tpu_custom_call.1} parent=186 // pred_region
        %s620 = sadd.s32 %s575, %s598
        %s621 = sadd.s32 %s620, 1
        %p622 = scmp.lt.s32.totalorder %s621, 23
        %s623 = scalar_select %p622, %s621, 23
        %s624 = ssub.s32 1, %s609
        %s625 = sld [smem:[#allocation6 + %s623]]
        %s626 = smul.addr %s625, 16
        %s627 = scalar_lea.hbm %s3, %s626
        %s628 = scalar_lea.vmem [#allocation2], %s624
        %s629 = scalar_lea.sflag [#allocation3], %s624
        // Predicated region
        $region194: #{tpu_custom_call.1} parent=192 // pred_check
          _
        $region195: #{tpu_custom_call.1} parent=192 // pred_check_branch
          %631 = sbr.rel target = $region197
        $region196: #{tpu_custom_call.1} parent=192 // pred_region
          %632 = sst [smem:[#allocation15]] [#allocation46]
          %633 = sst [smem:[#allocation16]] [#allocation45]
        $region197: #{tpu_custom_call.1} parent=192 // pred_fallthru
          _
        %635 = shalt.err (0)
        %s637 = sshll.u32 %s628, 4
        %s638 = int_to_ptr.vmem [resolvable:$true] %s637
        %640 = dma.hbm_to_vmem [thread:$0]  %s627, 16, %s638, %s629
      $region193: #{tpu_custom_call.1} parent=186 // pred_fallthru
        _
      %v641 = vld [vmem:[%s610] sm:$0x1]
      %v642 = vadd.f32 %v603, %v641
    $region187: #{tpu_custom_call.1} parent=1 // loop_footer
      %s600 = sadd.s32 %s598, 1
    $region188: #{tpu_custom_call.1} parent=1 // loop_footer_branch
      %597 = sbr.rel target = $region184
    $region189: #{tpu_custom_call.1} parent=1 // loop_exit
      _
    %p643 = scmp.gt.s32.totalorder %s576, 1
    %s644 = scalar_select %p643, %s576, 1
    %s645 = scvt.s32.f32 %s644
    %v646 = vstv %s645
    %v647 = vrcp.pop %v646
    %v648 = vmul.f32 %v603, %v647
    %649 = vst [vmem:[#allocation4 + $0x7] sm:$0x1] %v648
    %v650 = vld [vmem:[#allocation4] sm:$0xff]
    %v651 = vld [vmem:[#allocation9] sm:$0xff]
    %v652 = vld [vmem:[#allocation9 + $0x8] sm:$0xff]
    %v653 = vld [vmem:[#allocation9 + $0x10] sm:$0xff]
    %v654 = vld [vmem:[#allocation9 + $0x18] sm:$0xff]
    %v655 = vld [vmem:[#allocation9 + $0x20] sm:$0xff]
    %v656 = vld [vmem:[#allocation9 + $0x28] sm:$0xff]
    %v657 = vld [vmem:[#allocation9 + $0x30] sm:$0xff]
    %v658 = vld [vmem:[#allocation9 + $0x38] sm:$0xff]
    %v659 = vld [vmem:[#allocation9 + $0x40] sm:$0xff]
    %v660 = vld [vmem:[#allocation9 + $0x48] sm:$0xff]
    %v661 = vld [vmem:[#allocation9 + $0x50] sm:$0xff]
    %v662 = vld [vmem:[#allocation9 + $0x58] sm:$0xff]
    %v663 = vld [vmem:[#allocation9 + $0x60] sm:$0xff]
    %v664 = vld [vmem:[#allocation9 + $0x68] sm:$0xff]
    %v665 = vld [vmem:[#allocation9 + $0x70] sm:$0xff]
    %v666 = vld [vmem:[#allocation9 + $0x78] sm:$0xff]
    %v667 = vld [vmem:[%s5] sm:$0x1]
    %v669 = vlaneseq
    %v670 = vshrl.u32 %v669, 7
    %v671 = vsub.s32 0, %v670
    %v672 = vrot.slane %v667, %v671
    %674 = vmatprep.subr.mxu0 0.0
    %675 = vmatpush1.msra.mxu0 %v651
    %676 = vmatprep.subr.mxu0 0.0
    %677 = vmatpush1.msra.mxu0 %v652
    %678 = vmatprep.subr.mxu0 0.0
    %679 = vmatpush1.msra.mxu0 %v653
    %680 = vmatprep.subr.mxu0 0.0
    %681 = vmatpush1.msra.mxu0 %v654
    %682 = vmatprep.subr.mxu0 0.0
    %683 = vmatpush1.msra.mxu0 %v655
    %684 = vmatprep.subr.mxu0 0.0
    %685 = vmatpush1.msra.mxu0 %v656
    %686 = vmatprep.subr.mxu0 0.0
    %687 = vmatpush1.msra.mxu0 %v657
    %688 = vmatprep.subr.mxu0 0.0
    %689 = vmatpush1.msra.mxu0 %v658
    %690 = vmatprep.subr.mxu0 0.0
    %691 = vmatpush1.msra.mxu0 %v659
    %692 = vmatprep.subr.mxu0 0.0
    %693 = vmatpush1.msra.mxu0 %v660
    %694 = vmatprep.subr.mxu0 0.0
    %695 = vmatpush1.msra.mxu0 %v661
    %696 = vmatprep.subr.mxu0 0.0
    %697 = vmatpush1.msra.mxu0 %v662
    %698 = vmatprep.subr.mxu0 0.0
    %699 = vmatpush1.msra.mxu0 %v663
    %700 = vmatprep.subr.mxu0 0.0
    %701 = vmatpush1.msra.mxu0 %v664
    %702 = vmatprep.subr.mxu0 0.0
    %703 = vmatpush1.msra.mxu0 %v665
    %704 = vmatprep.subr.mxu0 0.0
    %705 = vmatpush1.msra.mxu0 %v666
    %706 = vmatprep.subr.mxu0 0.0
    %707 = vmatpush1.msra.mxu0 0.0
    %708 = vmatprep.subr.mxu0 0.0
    %709 = vmatpush1.msra.mxu0 0.0
    %710 = vmatprep.subr.mxu0 0.0
    %711 = vmatpush1.msra.mxu0 0.0
    %712 = vmatprep.subr.mxu0 0.0
    %713 = vmatpush1.msra.mxu0 0.0
    %714 = vmatprep.subr.mxu0 0.0
    %715 = vmatpush1.msra.mxu0 0.0
    %716 = vmatprep.subr.mxu0 0.0
    %717 = vmatpush1.msra.mxu0 0.0
    %718 = vmatprep.subr.mxu0 0.0
    %719 = vmatpush1.msra.mxu0 0.0
    %720 = vmatprep.subr.mxu0 0.0
    %721 = vmatpush1.msra.mxu0 0.0
    %722 = vmatprep.subr.mxu0 0.0
    %723 = vmatpush1.msra.mxu0 0.0
    %724 = vmatprep.subr.mxu0 0.0
    %725 = vmatpush1.msra.mxu0 0.0
    %726 = vmatprep.subr.mxu0 0.0
    %727 = vmatpush1.msra.mxu0 0.0
    %728 = vmatprep.subr.mxu0 0.0
    %729 = vmatpush1.msra.mxu0 0.0
    %730 = vmatprep.subr.mxu0 0.0
    %731 = vmatpush1.msra.mxu0 0.0
    %732 = vmatprep.subr.mxu0 0.0
    %733 = vmatpush1.msra.mxu0 0.0
    %734 = vmatprep.subr.mxu0 0.0
    %735 = vmatpush1.msra.mxu0 0.0
    %736 = vmatprep.subr.mxu0 0.0
    %737 = vmatpush1.msra.mxu0 0.0
    %738 = vmatprep.mubr.f32.mxu0 0.0
    %739 = vmatmul.mubr.f32.gmra.mrb[0].mxu0 %v650
    %v740 = vpop.f32.mrb[0].mxu0
    %v741 = vadd.f32 %v672, %v740
    %v742 = vpop.f32.mrb[0].mxu0
    %743 = vdwg.mxu0
    %744 = vst [vmem:[#allocation12] sm:$0xff] %v741
    // Predicated region
    $region198: #{tpu_custom_call.1} parent=1 // pred_check
      _
    $region199: #{tpu_custom_call.1} parent=1 // pred_check_branch
      %746 = sbr.rel (0) target = $region201
    $region200: #{tpu_custom_call.1} parent=1 // pred_region
      %s748 = ssub.s32 128, 128
      %749 = vsyncadd [#allocation11], %s748
      %s751 = sshll.u32 [#allocation12], 4
      %s752 = int_to_ptr.vmem [resolvable:$true] %s751
      %754 = dma.vmem_to_hbm [thread:$0]  %s752, 128, %s6, [#allocation11]
    $region201: #{tpu_custom_call.1} parent=1 // pred_fallthru
      _
    // Predicated region
    $region202: #{tpu_custom_call.1} parent=1 // pred_check
      _
    $region203: #{tpu_custom_call.1} parent=1 // pred_check_branch
      %756 = sbr.rel (0) target = $region205
    $region204: #{tpu_custom_call.1} parent=1 // pred_region
      %757 = dma.done [#allocation11], 128
    $region205: #{tpu_custom_call.1} parent=1 // pred_fallthru
      _
    %758 = vsyncpa [#allocation10], 1
    %759 = vsyncpa [#allocation11], 1
  %760 = vsyncmov [#allocation3]
  %s761 = vpop.sfrf %760
  %p762 = scmp.eq.s32.totalorder %s761, 0
  %p763 = pneg %p762
  %765 = shalt.err (%p763)
  %s766 = scalar_lea.sflag [#allocation3], 1
  %767 = vsyncmov %s766
  %s768 = vpop.sfrf %767
  %p769 = scmp.eq.s32.totalorder %s768, 0
  %p770 = pneg %p769
  %772 = shalt.err (%p770)

</llo_original>
